<compile_context>
chip_gen: v6e
topology: v6e:2x2x1
jax: 0.10.0
libtpu: 0.0.40
codegen_flags: <defaults>
</compile_context>

<pallas_src>
import numpy as np
import jax
import jax.numpy as jnp
from jax.experimental import pallas as pl
from jax.experimental.pallas import tpu as pltpu

# ----------------------------- hparams (synthetic, small) --------------------
ATOM_FDIM = 16           # stand-in for chemprop.features.get_atom_fdim()
BOND_FDIM = 24           # stand-in for chemprop.features.get_bond_fdim()
MPN_HIDDEN = 32          # hparams.mpn_hidden_size
MPN_DEPTH = 3            # hparams.mpn_depth
UNDIRECTED = False       # hparams.undirected_mpn
MOL_FEATURES_SIZE = 8    # hparams.mol_features_size
FFNN_HIDDEN = 32         # hparams.ffnn_hidden_size
ENC_HIDDEN = 16          # hparams.enc_hidden_size
NUM_FFNN_LAYERS = 3      # hparams.num_ffnn_layers
N_MID = NUM_FFNN_LAYERS - 2   # number of hidden->hidden FFNN layers

MAX_NB = 4               # max in-bonds per atom (a2b width)

LANE = 128               # TPU lane width: feature/hidden dims padded to this
SUB = 8                  # sublane quantum: row dims padded to a multiple of this


def _rup(n, m):
    return ((n + m - 1) // m) * m


def _pad2(x, rows, cols):
    x = jnp.asarray(x, jnp.float32)
    r, c = x.shape
    return jnp.pad(x, ((0, rows - r), (0, cols - c)))


def _vmem_specs(n):
    return [pl.BlockSpec(memory_space=pltpu.MemorySpace.VMEM) for _ in range(n)]


# ----------------------------- fused encoder kernel --------------------------
def make_encoder_kernel(n_mid):
    def kernel(*refs):
        (fa_ref, fb_ref, a_ref, c_ref, pool_ref, mf_ref,
         wi_ref, wh_ref, woa_ref, wom_ref, bo_ref,
         w1m_ref, w1f_ref, b1_ref) = refs[:14]
        idx = 14
        mids = []
        for _ in range(n_mid):
            mids.append((refs[idx], refs[idx + 1]))
            idx += 2
        wout_ref, bout_ref = refs[idx], refs[idx + 1]
        o_ref = refs[idx + 2]

        # Hoist invariant operand loads out of the (unrolled) depth loop.
        A = a_ref[...]        # [NA_P, NB_P] bond->atom incidence (col 0 zeroed)
        C = c_ref[...]        # [NB_P, NB_P] combined operator B2A@A - REV
        wh_t = wh_ref[...]    # [H_P, H_P]

        # ----- MPN -----
        # inputs = W_i(f_bonds); message = relu(inputs)
        inputs = jnp.dot(fb_ref[...], wi_ref[...], preferred_element_type=jnp.float32)
        message = jnp.maximum(inputs, 0.0)
        # Dropout == inference-mode identity.
        # TODO(synk): undirected_mpn=True would need the REV permutation passed in
        #             for the (message + message[b2revb]) / 2 step.
        for _ in range(MPN_DEPTH - 1):
            # a_message[b2a] - message[b2revb]  ==  (B2A@A - REV) @ message  ==  C @ message
            m = jnp.dot(C, message, preferred_element_type=jnp.float32)
            message = jnp.maximum(
                inputs + jnp.dot(m, wh_t, preferred_element_type=jnp.float32), 0.0)

        # final aggregation + W_o on concat([f_atoms, a_message]) (split matmul)
        a_message = jnp.dot(A, message, preferred_element_type=jnp.float32)
        atom_hiddens = jnp.maximum(
            jnp.dot(fa_ref[...], woa_ref[...], preferred_element_type=jnp.float32)
            + jnp.dot(a_message, wom_ref[...], preferred_element_type=jnp.float32)
            + bo_ref[...],
            0.0)
        # mean pool: pool rows are pre-scaled by 1/a_size -> single matmul, no divide
        mol_vecs = jnp.dot(pool_ref[...], atom_hiddens,
                           preferred_element_type=jnp.float32)

        # ----- FFNN head (fused: mol_vecs never leaves VMEM) -----
        h = jnp.maximum(
            jnp.dot(mol_vecs, w1m_ref[...], preferred_element_type=jnp.float32)
            + jnp.dot(mf_ref[...], w1f_ref[...], preferred_element_type=jnp.float32)
            + b1_ref[...],
            0.0)
        for w_ref, b_ref in mids:
            h = jnp.maximum(
                jnp.dot(h, w_ref[...], preferred_element_type=jnp.float32) + b_ref[...],
                0.0)
        o_ref[...] = jnp.maximum(
            jnp.dot(h, wout_ref[...], preferred_element_type=jnp.float32) + bout_ref[...],
            0.0)
    return kernel


def pad_params(p):
    pp = {}
    pp["wi_t"] = _pad2(p["wi_t"], LANE, LANE)
    pp["wh_t"] = _pad2(p["wh_t"], LANE, LANE)
    pp["wo_a_t"] = _pad2(p["wo_a_t"], LANE, LANE)
    pp["wo_m_t"] = _pad2(p["wo_m_t"], LANE, LANE)
    pp["bo"] = _pad2(p["bo"], 1, LANE)
    pp["w1m_t"] = _pad2(p["w1m_t"], LANE, LANE)
    pp["w1f_t"] = _pad2(p["w1f_t"], LANE, LANE)
    pp["b1"] = _pad2(p["b1"], 1, LANE)
    pp["mid"] = [(_pad2(w, LANE, LANE), _pad2(b, 1, LANE)) for w, b in p["mid"]]
    pp["wout_t"] = _pad2(p["wout_t"], LANE, LANE)
    pp["bout"] = _pad2(p["bout"], 1, LANE)
    return pp


def molecule_encoder_forward(f_atoms, f_bonds, A, C, pool, mol_features, params):
    n_atoms = f_atoms.shape[0]
    n_bonds = f_bonds.shape[0]
    n_mols = pool.shape[0]
    na_p, nb_p, nm_p = _rup(n_atoms, SUB), _rup(n_bonds, SUB), _rup(n_mols, SUB)

    fa = _pad2(f_atoms, na_p, LANE)
    fb = _pad2(f_bonds, nb_p, LANE)
    a_p = _pad2(A, na_p, nb_p)
    c_p = _pad2(C, nb_p, nb_p)
    pool_p = _pad2(pool, nm_p, na_p)
    mf_p = _pad2(mol_features, nm_p, LANE)

    pp = pad_params(params)
    args = [fa, fb, a_p, c_p, pool_p, mf_p,
            pp["wi_t"], pp["wh_t"], pp["wo_a_t"], pp["wo_m_t"], pp["bo"],
            pp["w1m_t"], pp["w1f_t"], pp["b1"]]
    for w, b in pp["mid"]:
        args.extend([w, b])
    args.extend([pp["wout_t"], pp["bout"]])

    out_p = pl.pallas_call(
        make_encoder_kernel(N_MID),
        out_shape=jax.ShapeDtypeStruct((nm_p, LANE), jnp.float32),
        in_specs=_vmem_specs(len(args)),
        out_specs=pl.BlockSpec(memory_space=pltpu.MemorySpace.VMEM),
        compiler_params=pltpu.CompilerParams(vmem_limit_bytes=32 * 1024 * 1024),
    )(*args)
    # strip row / lane padding back to logical shape
    return out_p[:n_mols, :ENC_HIDDEN]


# ----------------------------- glue: synthetic graph & params ----------------
def build_graph():
    """Two molecules, each a 6-atom ring; index 0 is the chemprop padding node."""
    n_mols, atoms_per_mol = 2, 6
    n_atoms = 1 + n_mols * atoms_per_mol
    n_bonds = 1 + n_mols * atoms_per_mol * 2   # two directed bonds per ring edge

    a2b_slots = [[] for _ in range(n_atoms)]
    b2a = [0] * n_bonds
    b2revb = [0] * n_bonds
    a_scope = []
    b = 1
    for m in range(n_mols):
        base = 1 + m * atoms_per_mol
        a_scope.append((base, atoms_per_mol))
        for k in range(atoms_per_mol):
            a1 = base + k
            a2 = base + (k + 1) % atoms_per_mol
            b12, b21 = b, b + 1
            b += 2
            b2a[b12], b2a[b21] = a1, a2
            b2revb[b12], b2revb[b21] = b21, b12
            a2b_slots[a2].append(b12)   # bond a1->a2 is incoming to a2
            a2b_slots[a1].append(b21)   # bond a2->a1 is incoming to a1
    a2b = np.array([(s + [0] * MAX_NB)[:MAX_NB] for s in a2b_slots], np.int32)
    b2a = np.array(b2a, np.int32)
    b2revb = np.array(b2revb, np.int32)

    # dense incidence / permutation matrices (host-side, tiny)
    A = np.zeros((n_atoms, n_bonds), np.float32)
    for a in range(n_atoms):
        for bb in a2b[a]:
            A[a, bb] += 1.0
    A[:, 0] = 0.0   # padding bond contributes nothing (robust even if W_i/W_h gain bias)
    B2A = np.zeros((n_bonds, n_atoms), np.float32)
    B2A[np.arange(n_bonds), b2a] = 1.0
    REV = np.zeros((n_bonds, n_bonds), np.float32)
    REV[np.arange(n_bonds), b2revb] = 1.0
    # combined per-depth graph operator: (B2A @ A - REV) @ msg == a_msg[b2a] - msg[b2revb]
    C = B2A @ A - REV
    # mean-pool matrix with 1/a_size folded in (removes the in-kernel divide + cnt input)
    pool = np.zeros((n_mols, n_atoms), np.float32)
    for i, (a_start, a_size) in enumerate(a_scope):
        if a_size > 0:
            pool[i, a_start:a_start + a_size] = 1.0 / float(a_size)

    idx = dict(a2b=jnp.asarray(a2b), b2a=jnp.asarray(b2a),
               b2revb=jnp.asarray(b2revb), a_scope=a_scope)
    return n_atoms, n_bonds, idx, (jnp.asarray(A), jnp.asarray(C), jnp.asarray(pool))


def xavier(key, shape):
    fan_out, fan_in = shape
    std = (2.0 / (fan_in + fan_out)) ** 0.5
    return std * jax.random.normal(key, shape, dtype=jnp.float32)


def init_params(key):
    ks = jax.random.split(key, 12)
    p = {}
    # weights stored pre-transposed ([in, out]) so kernels do y = x @ W_t + b
    p["wi_t"] = xavier(ks[0], (MPN_HIDDEN, BOND_FDIM)).T               # W_i (no bias)
    p["wh_t"] = xavier(ks[1], (MPN_HIDDEN, MPN_HIDDEN)).T              # W_h (no bias)
    wo = xavier(ks[2], (MPN_HIDDEN, ATOM_FDIM + MPN_HIDDEN))           # W_o
    p["wo_a_t"] = wo[:, :ATOM_FDIM].T
    p["wo_m_t"] = wo[:, ATOM_FDIM:].T
    p["bo"] = 0.1 * jax.random.normal(ks[3], (1, MPN_HIDDEN), jnp.float32)
    w1 = xavier(ks[4], (FFNN_HIDDEN, MPN_HIDDEN + MOL_FEATURES_SIZE))  # FFNN layer 1
    p["w1m_t"] = w1[:, :MPN_HIDDEN].T
    p["w1f_t"] = w1[:, MPN_HIDDEN:].T
    p["b1"] = 0.1 * jax.random.normal(ks[5], (1, FFNN_HIDDEN), jnp.float32)
    p["mid"] = []
    for i in range(N_MID):
        w = xavier(ks[6 + i], (FFNN_HIDDEN, FFNN_HIDDEN)).T
        b = 0.1 * jax.random.normal(ks[8 + i], (1, FFNN_HIDDEN), jnp.float32)
        p["mid"].append((w, b))
    p["wout_t"] = xavier(ks[10], (ENC_HIDDEN, FFNN_HIDDEN)).T
    p["bout"] = 0.1 * jax.random.normal(ks[11], (1, ENC_HIDDEN), jnp.float32)
    return p


# ----------------------------- pure-JAX reference (torch semantics) ----------
def reference_forward(f_atoms, f_bonds, idx, mol_features, params):
    a2b, b2a, b2revb, a_scope = idx["a2b"], idx["b2a"], idx["b2revb"], idx["a_scope"]
    inputs = f_bonds @ params["wi_t"]
    message = jnp.maximum(inputs, 0.0)
    for _ in range(MPN_DEPTH - 1):
        if UNDIRECTED:
            message = (message + message[b2revb]) / 2
        a_message = message[a2b].sum(axis=1)
        rev_message = message[b2revb]
        message = a_message[b2a] - rev_message
        message = jnp.maximum(inputs + message @ params["wh_t"], 0.0)
    a_message = message[a2b].sum(axis=1)
    atom_h = jnp.maximum(f_atoms @ params["wo_a_t"] + a_message @ params["wo_m_t"]
                         + params["bo"], 0.0)
    vecs = []
    for a_start, a_size in a_scope:
        vecs.append(atom_h[a_start:a_start + a_size].sum(axis=0) / a_size)
    mol_vecs = jnp.stack(vecs, axis=0)
    h = jnp.maximum(mol_vecs @ params["w1m_t"] + mol_features @ params["w1f_t"]
                    + params["b1"], 0.0)
    for w, b in params["mid"]:
        h = jnp.maximum(h @ w + b, 0.0)
    return jnp.maximum(h @ params["wout_t"] + params["bout"], 0.0)


# ----------------------------- main -------------------------------------------
if __name__ == "__main__":
    key = jax.random.PRNGKey(0)
    k_fa, k_fb, k_mf, k_p = jax.random.split(key, 4)

    n_atoms, n_bonds, idx, (A, C, pool) = build_graph()

    f_atoms = jax.random.normal(k_fa, (n_atoms, ATOM_FDIM), jnp.float32)
    f_atoms = f_atoms.at[0].set(0.0)          # chemprop padding atom
    f_bonds = jax.random.normal(k_fb, (n_bonds, BOND_FDIM), jnp.float32)
    f_bonds = f_bonds.at[0].set(0.0)          # chemprop padding bond
    mol_features = jax.random.normal(k_mf, (2, MOL_FEATURES_SIZE), jnp.float32)

    params = init_params(k_p)

    out = molecule_encoder_forward(f_atoms, f_bonds, A, C, pool, mol_features, params)
    out = jax.block_until_ready(out)

    ref = reference_forward(f_atoms, f_bonds, idx, mol_features, params)
    assert out.shape == (2, ENC_HIDDEN), out.shape
    assert bool(jnp.all(jnp.isfinite(out)))
    assert bool(jnp.allclose(out, ref, atol=1e-2, rtol=1e-2)), (out, ref)
    print("KERNEL_OK")
</pallas_src>

<mosaic_0001>
module attributes {stable_mosaic.version = 11 : i64} {
  func.func @kernel(%arg0: memref<16x128xf32, #tpu.memory_space<vmem>>, %arg1: memref<32x128xf32, #tpu.memory_space<vmem>>, %arg2: memref<16x32xf32, #tpu.memory_space<vmem>>, %arg3: memref<32x32xf32, #tpu.memory_space<vmem>>, %arg4: memref<8x16xf32, #tpu.memory_space<vmem>>, %arg5: memref<8x128xf32, #tpu.memory_space<vmem>>, %arg6: memref<128x128xf32, #tpu.memory_space<vmem>>, %arg7: memref<128x128xf32, #tpu.memory_space<vmem>>, %arg8: memref<128x128xf32, #tpu.memory_space<vmem>>, %arg9: memref<128x128xf32, #tpu.memory_space<vmem>>, %arg10: memref<1x128xf32, #tpu.memory_space<vmem>>, %arg11: memref<128x128xf32, #tpu.memory_space<vmem>>, %arg12: memref<128x128xf32, #tpu.memory_space<vmem>>, %arg13: memref<1x128xf32, #tpu.memory_space<vmem>>, %arg14: memref<128x128xf32, #tpu.memory_space<vmem>>, %arg15: memref<1x128xf32, #tpu.memory_space<vmem>>, %arg16: memref<128x128xf32, #tpu.memory_space<vmem>>, %arg17: memref<1x128xf32, #tpu.memory_space<vmem>>, %arg18: memref<8x128xf32, #tpu.memory_space<vmem>>) attributes {dimension_semantics = [], scalar_prefetch = 0 : i64, scratch_operands = 0 : i64, tpu.core_type = #tpu.core_type<tc>} {
    %c0 = arith.constant 0 : index
    %c0_0 = arith.constant 0 : index
    %0 = vector.load %arg2[%c0, %c0_0] : memref<16x32xf32, #tpu.memory_space<vmem>>, vector<16x32xf32>
    %c0_1 = arith.constant 0 : index
    %c0_2 = arith.constant 0 : index
    %1 = vector.load %arg3[%c0_1, %c0_2] : memref<32x32xf32, #tpu.memory_space<vmem>>, vector<32x32xf32>
    %c0_3 = arith.constant 0 : index
    %c0_4 = arith.constant 0 : index
    %2 = vector.load %arg7[%c0_3, %c0_4] : memref<128x128xf32, #tpu.memory_space<vmem>>, vector<128x128xf32>
    %c0_5 = arith.constant 0 : index
    %c0_6 = arith.constant 0 : index
    %3 = vector.load %arg1[%c0_5, %c0_6] : memref<32x128xf32, #tpu.memory_space<vmem>>, vector<32x128xf32>
    %c0_7 = arith.constant 0 : index
    %c0_8 = arith.constant 0 : index
    %4 = vector.load %arg6[%c0_7, %c0_8] : memref<128x128xf32, #tpu.memory_space<vmem>>, vector<128x128xf32>
    %cst = arith.constant dense<0.000000e+00> : vector<32x128xf32>
    %5 = tpu.matmul %3, %4, %cst {dimension_numbers = #tpu.dot_dimension_numbers<[1], [0], [0], [1], [0, 0, 1, 1], [], []>} : vector<32x128xf32>, vector<128x128xf32>, vector<32x128xf32> -> vector<32x128xf32>
    %cst_9 = arith.constant 0.000000e+00 : f32
    %6 = vector.broadcast %cst_9 : f32 to vector<32x128xf32>
    %7 = arith.maximumf %5, %6 : vector<32x128xf32>
    %cst_10 = arith.constant dense<0.000000e+00> : vector<32x128xf32>
    %8 = tpu.matmul %1, %7, %cst_10 {dimension_numbers = #tpu.dot_dimension_numbers<[1], [0], [0], [1], [0, 0, 1, 1], [], []>} : vector<32x32xf32>, vector<32x128xf32>, vector<32x128xf32> -> vector<32x128xf32>
    %cst_11 = arith.constant dense<0.000000e+00> : vector<32x128xf32>
    %9 = tpu.matmul %8, %2, %cst_11 {dimension_numbers = #tpu.dot_dimension_numbers<[1], [0], [0], [1], [0, 0, 1, 1], [], []>} : vector<32x128xf32>, vector<128x128xf32>, vector<32x128xf32> -> vector<32x128xf32>
    %10 = arith.addf %5, %9 : vector<32x128xf32>
    %cst_12 = arith.constant 0.000000e+00 : f32
    %11 = vector.broadcast %cst_12 : f32 to vector<32x128xf32>
    %12 = arith.maximumf %10, %11 : vector<32x128xf32>
    %cst_13 = arith.constant dense<0.000000e+00> : vector<32x128xf32>
    %13 = tpu.matmul %1, %12, %cst_13 {dimension_numbers = #tpu.dot_dimension_numbers<[1], [0], [0], [1], [0, 0, 1, 1], [], []>} : vector<32x32xf32>, vector<32x128xf32>, vector<32x128xf32> -> vector<32x128xf32>
    %cst_14 = arith.constant dense<0.000000e+00> : vector<32x128xf32>
    %14 = tpu.matmul %13, %2, %cst_14 {dimension_numbers = #tpu.dot_dimension_numbers<[1], [0], [0], [1], [0, 0, 1, 1], [], []>} : vector<32x128xf32>, vector<128x128xf32>, vector<32x128xf32> -> vector<32x128xf32>
    %15 = arith.addf %5, %14 : vector<32x128xf32>
    %cst_15 = arith.constant 0.000000e+00 : f32
    %16 = vector.broadcast %cst_15 : f32 to vector<32x128xf32>
    %17 = arith.maximumf %15, %16 : vector<32x128xf32>
    %cst_16 = arith.constant dense<0.000000e+00> : vector<16x128xf32>
    %18 = tpu.matmul %0, %17, %cst_16 {dimension_numbers = #tpu.dot_dimension_numbers<[1], [0], [0], [1], [0, 0, 1, 1], [], []>} : vector<16x32xf32>, vector<32x128xf32>, vector<16x128xf32> -> vector<16x128xf32>
    %c0_17 = arith.constant 0 : index
    %c0_18 = arith.constant 0 : index
    %19 = vector.load %arg0[%c0_17, %c0_18] : memref<16x128xf32, #tpu.memory_space<vmem>>, vector<16x128xf32>
    %c0_19 = arith.constant 0 : index
    %c0_20 = arith.constant 0 : index
    %20 = vector.load %arg8[%c0_19, %c0_20] : memref<128x128xf32, #tpu.memory_space<vmem>>, vector<128x128xf32>
    %cst_21 = arith.constant dense<0.000000e+00> : vector<16x128xf32>
    %21 = tpu.matmul %19, %20, %cst_21 {dimension_numbers = #tpu.dot_dimension_numbers<[1], [0], [0], [1], [0, 0, 1, 1], [], []>} : vector<16x128xf32>, vector<128x128xf32>, vector<16x128xf32> -> vector<16x128xf32>
    %c0_22 = arith.constant 0 : index
    %c0_23 = arith.constant 0 : index
    %22 = vector.load %arg9[%c0_22, %c0_23] : memref<128x128xf32, #tpu.memory_space<vmem>>, vector<128x128xf32>
    %cst_24 = arith.constant dense<0.000000e+00> : vector<16x128xf32>
    %23 = tpu.matmul %18, %22, %cst_24 {dimension_numbers = #tpu.dot_dimension_numbers<[1], [0], [0], [1], [0, 0, 1, 1], [], []>} : vector<16x128xf32>, vector<128x128xf32>, vector<16x128xf32> -> vector<16x128xf32>
    %24 = arith.addf %21, %23 : vector<16x128xf32>
    %c0_25 = arith.constant 0 : index
    %c0_26 = arith.constant 0 : index
    %25 = vector.load %arg10[%c0_25, %c0_26] : memref<1x128xf32, #tpu.memory_space<vmem>>, vector<1x128xf32>
    %26 = vector.broadcast %25 : vector<1x128xf32> to vector<16x128xf32>
    %27 = arith.addf %24, %26 : vector<16x128xf32>
    %cst_27 = arith.constant 0.000000e+00 : f32
    %28 = vector.broadcast %cst_27 : f32 to vector<16x128xf32>
    %29 = arith.maximumf %27, %28 : vector<16x128xf32>
    %c0_28 = arith.constant 0 : index
    %c0_29 = arith.constant 0 : index
    %30 = vector.load %arg4[%c0_28, %c0_29] : memref<8x16xf32, #tpu.memory_space<vmem>>, vector<8x16xf32>
    %cst_30 = arith.constant dense<0.000000e+00> : vector<8x128xf32>
    %31 = tpu.matmul %30, %29, %cst_30 {dimension_numbers = #tpu.dot_dimension_numbers<[1], [0], [0], [1], [0, 0, 1, 1], [], []>} : vector<8x16xf32>, vector<16x128xf32>, vector<8x128xf32> -> vector<8x128xf32>
    %c0_31 = arith.constant 0 : index
    %c0_32 = arith.constant 0 : index
    %32 = vector.load %arg11[%c0_31, %c0_32] : memref<128x128xf32, #tpu.memory_space<vmem>>, vector<128x128xf32>
    %cst_33 = arith.constant dense<0.000000e+00> : vector<8x128xf32>
    %33 = tpu.matmul %31, %32, %cst_33 {dimension_numbers = #tpu.dot_dimension_numbers<[1], [0], [0], [1], [0, 0, 1, 1], [], []>} : vector<8x128xf32>, vector<128x128xf32>, vector<8x128xf32> -> vector<8x128xf32>
    %c0_34 = arith.constant 0 : index
    %c0_35 = arith.constant 0 : index
    %34 = vector.load %arg5[%c0_34, %c0_35] : memref<8x128xf32, #tpu.memory_space<vmem>>, vector<8x128xf32>
    %c0_36 = arith.constant 0 : index
    %c0_37 = arith.constant 0 : index
    %35 = vector.load %arg12[%c0_36, %c0_37] : memref<128x128xf32, #tpu.memory_space<vmem>>, vector<128x128xf32>
    %cst_38 = arith.constant dense<0.000000e+00> : vector<8x128xf32>
    %36 = tpu.matmul %34, %35, %cst_38 {dimension_numbers = #tpu.dot_dimension_numbers<[1], [0], [0], [1], [0, 0, 1, 1], [], []>} : vector<8x128xf32>, vector<128x128xf32>, vector<8x128xf32> -> vector<8x128xf32>
    %37 = arith.addf %33, %36 : vector<8x128xf32>
    %c0_39 = arith.constant 0 : index
    %c0_40 = arith.constant 0 : index
    %38 = vector.load %arg13[%c0_39, %c0_40] : memref<1x128xf32, #tpu.memory_space<vmem>>, vector<1x128xf32>
    %39 = vector.broadcast %38 : vector<1x128xf32> to vector<8x128xf32>
    %40 = arith.addf %37, %39 : vector<8x128xf32>
    %cst_41 = arith.constant 0.000000e+00 : f32
    %41 = vector.broadcast %cst_41 : f32 to vector<8x128xf32>
    %42 = arith.maximumf %40, %41 : vector<8x128xf32>
    %c0_42 = arith.constant 0 : index
    %c0_43 = arith.constant 0 : index
    %43 = vector.load %arg14[%c0_42, %c0_43] : memref<128x128xf32, #tpu.memory_space<vmem>>, vector<128x128xf32>
    %cst_44 = arith.constant dense<0.000000e+00> : vector<8x128xf32>
    %44 = tpu.matmul %42, %43, %cst_44 {dimension_numbers = #tpu.dot_dimension_numbers<[1], [0], [0], [1], [0, 0, 1, 1], [], []>} : vector<8x128xf32>, vector<128x128xf32>, vector<8x128xf32> -> vector<8x128xf32>
    %c0_45 = arith.constant 0 : index
    %c0_46 = arith.constant 0 : index
    %45 = vector.load %arg15[%c0_45, %c0_46] : memref<1x128xf32, #tpu.memory_space<vmem>>, vector<1x128xf32>
    %46 = vector.broadcast %45 : vector<1x128xf32> to vector<8x128xf32>
    %47 = arith.addf %44, %46 : vector<8x128xf32>
    %cst_47 = arith.constant 0.000000e+00 : f32
    %48 = vector.broadcast %cst_47 : f32 to vector<8x128xf32>
    %49 = arith.maximumf %47, %48 : vector<8x128xf32>
    %c0_48 = arith.constant 0 : index
    %c0_49 = arith.constant 0 : index
    %50 = vector.load %arg16[%c0_48, %c0_49] : memref<128x128xf32, #tpu.memory_space<vmem>>, vector<128x128xf32>
    %cst_50 = arith.constant dense<0.000000e+00> : vector<8x128xf32>
    %51 = tpu.matmul %49, %50, %cst_50 {dimension_numbers = #tpu.dot_dimension_numbers<[1], [0], [0], [1], [0, 0, 1, 1], [], []>} : vector<8x128xf32>, vector<128x128xf32>, vector<8x128xf32> -> vector<8x128xf32>
    %c0_51 = arith.constant 0 : index
    %c0_52 = arith.constant 0 : index
    %52 = vector.load %arg17[%c0_51, %c0_52] : memref<1x128xf32, #tpu.memory_space<vmem>>, vector<1x128xf32>
    %53 = vector.broadcast %52 : vector<1x128xf32> to vector<8x128xf32>
    %54 = arith.addf %51, %53 : vector<8x128xf32>
    %cst_53 = arith.constant 0.000000e+00 : f32
    %55 = vector.broadcast %cst_53 : f32 to vector<8x128xf32>
    %56 = arith.maximumf %54, %55 : vector<8x128xf32>
    %c0_54 = arith.constant 0 : index
    %c0_55 = arith.constant 0 : index
    %57 = vector.load %arg18[%c0_54, %c0_55] : memref<8x128xf32, #tpu.memory_space<vmem>>, vector<8x128xf32>
    tpu.vector_store %arg18[%c0_54, %c0_55], %56 {strides = array<i32>} : memref<8x128xf32, #tpu.memory_space<vmem>>, vector<8x128xf32>,
    return
  }
}

</mosaic_0001>

<llo_original>
// kernel: tpu_custom_call.1
$region0: #{tpu_custom_call.1}
  #allocation0 [shape = 'u32[]', space=smem, size = 0x4, offset = 0x4, fixed_abs, tag = 'smem constant byte address 0x4 - core index']
  #allocation1 [shape = 'u32[144,128]{1,0:T(1,128)}', space=vmem, size = 0x12000, scoped, tag = 'internal scratch']
  %s0 = inlined_call_operand.hbm [shape: f32[16,128], index: 0, kind: input, shape index: {}]
  %s1 = inlined_call_operand.hbm [shape: f32[32,128], index: 1, kind: input, shape index: {}]
  %s2 = inlined_call_operand.hbm [shape: f32[16,32], index: 2, kind: input, shape index: {}]
  %s3 = inlined_call_operand.hbm [shape: f32[32,32], index: 3, kind: input, shape index: {}]
  %s4 = inlined_call_operand.hbm [shape: f32[8,16], index: 4, kind: input, shape index: {}]
  %s5 = inlined_call_operand.vmem [shape: f32[8,128], index: 5, kind: input, shape index: {}]
  %s6 = inlined_call_operand.hbm [shape: f32[128,128], index: 6, kind: input, shape index: {}]
  %s7 = inlined_call_operand.hbm [shape: f32[128,128], index: 7, kind: input, shape index: {}]
  %s8 = inlined_call_operand.hbm [shape: f32[128,128], index: 8, kind: input, shape index: {}]
  %s9 = inlined_call_operand.hbm [shape: f32[128,128], index: 9, kind: input, shape index: {}]
  %s10 = inlined_call_operand.vmem [shape: f32[1,128], index: 10, kind: input, shape index: {}]
  %s11 = inlined_call_operand.hbm [shape: f32[128,128], index: 11, kind: input, shape index: {}]
  %s12 = inlined_call_operand.hbm [shape: f32[128,128], index: 12, kind: input, shape index: {}]
  %s13 = inlined_call_operand.vmem [shape: f32[1,128], index: 13, kind: input, shape index: {}]
  %s14 = inlined_call_operand.hbm [shape: f32[128,128], index: 14, kind: input, shape index: {}]
  %s15 = inlined_call_operand.vmem [shape: f32[1,128], index: 15, kind: input, shape index: {}]
  %s16 = inlined_call_operand.hbm [shape: f32[128,128], index: 16, kind: input, shape index: {}]
  %s17 = inlined_call_operand.vmem [shape: f32[1,128], index: 17, kind: input, shape index: {}]
  %s18 = inlined_call_operand.hbm [shape: f32[8,128], index: 18, kind: output, shape index: {}]
  %s19 = sld [smem:[#allocation0]]
  $region134: #{tpu_custom_call.1} parent=0
    _
  %s21 = ssub.s32 1, %s19
  %s22 = scalar_select 0, %s21, %s19
  $region1: #{tpu_custom_call.1} parent=0
    #allocation2 [shape = 'u8[8192]{0}', space=vmem, size = 0x2000, scoped, tag = 'input window, operand 0, single buffered']
    #allocation3 [shape = 's32[1]{0}', space=sflag, size = 0x4, scoped, tag = 'scoped memory for tpu_custom_call.1']
    #allocation4 [shape = 's32[1]{0}', space=sflag, size = 0x4, scoped, tag = 'scoped memory for tpu_custom_call.1']
    #allocation5 [shape = 'u8[16384]{0}', space=vmem, size = 0x4000, scoped, tag = 'input window, operand 1, single buffered']
    #allocation6 [shape = 's32[1]{0}', space=sflag, size = 0x4, scoped, tag = 'scoped memory for tpu_custom_call.1']
    #allocation7 [shape = 'u8[8192]{0}', space=vmem, size = 0x2000, scoped, tag = 'input window, operand 2, single buffered']
    #allocation8 [shape = 'u8[16384]{0}', space=vmem, size = 0x4000, scoped, tag = 'input window, operand 3, single buffered']
    #allocation9 [shape = 's32[1]{0}', space=sflag, size = 0x4, scoped, tag = 'scoped memory for tpu_custom_call.1']
    #allocation10 [shape = 'u8[4096]{0}', space=vmem, size = 0x1000, scoped, tag = 'input window, operand 4, single buffered']
    #allocation11 [shape = 'u8[65536]{0}', space=vmem, size = 0x10000, scoped, tag = 'input window, operand 6, single buffered']
    #allocation12 [shape = 's32[1]{0}', space=sflag, size = 0x4, scoped, tag = 'scoped memory for tpu_custom_call.1']
    #allocation13 [shape = 'u8[65536]{0}', space=vmem, size = 0x10000, scoped, tag = 'input window, operand 7, single buffered']
    #allocation14 [shape = 'u8[65536]{0}', space=vmem, size = 0x10000, scoped, tag = 'input window, operand 8, single buffered']
    #allocation15 [shape = 's32[1]{0}', space=sflag, size = 0x4, scoped, tag = 'scoped memory for tpu_custom_call.1']
    #allocation16 [shape = 'u8[65536]{0}', space=vmem, size = 0x10000, scoped, tag = 'input window, operand 9, single buffered']
    #allocation17 [shape = 'u8[65536]{0}', space=vmem, size = 0x10000, scoped, tag = 'input window, operand 11, single buffered']
    #allocation18 [shape = 's32[1]{0}', space=sflag, size = 0x4, scoped, tag = 'scoped memory for tpu_custom_call.1']
    #allocation19 [shape = 'u8[65536]{0}', space=vmem, size = 0x10000, scoped, tag = 'input window, operand 12, single buffered']
    #allocation20 [shape = 'u8[65536]{0}', space=vmem, size = 0x10000, scoped, tag = 'input window, operand 14, single buffered']
    #allocation21 [shape = 's32[1]{0}', space=sflag, size = 0x4, scoped, tag = 'scoped memory for tpu_custom_call.1']
    #allocation22 [shape = 'u8[65536]{0}', space=vmem, size = 0x10000, scoped, tag = 'input window, operand 16, single buffered']
    #allocation23 [shape = 'u8[4096]{0}', space=vmem, size = 0x1000, scoped, tag = 'output window, operand 0, single buffered']
    %23 = vsyncpa [#allocation3], 0
    %24 = vsyncpa [#allocation6], 0
    %25 = vsyncpa [#allocation9], 0
    %26 = vsyncpa [#allocation12], 0
    %27 = vsyncpa [#allocation15], 0
    %28 = vsyncpa [#allocation18], 0
    %29 = vsyncpa [#allocation21], 0
    %30 = vsyncpa [#allocation4], 0
    // Predicated region
    $region2: #{tpu_custom_call.1} parent=1 // pred_check
      _
    $region3: #{tpu_custom_call.1} parent=1 // pred_check_branch
      %32 = sbr.rel (0) target = $region5
    $region4: #{tpu_custom_call.1} parent=1 // pred_region
      %s34 = ssub.s32 256, 256
      %35 = vsyncadd [#allocation3], %s34
      %s36 = sshll.u32 [#allocation2], 4
      %s37 = int_to_ptr.vmem [resolvable:$true] %s36
      %42 = dma.hbm_to_vmem [thread:$0]  %s0, 256, %s37, [#allocation3], 128, 128, 8
    $region5: #{tpu_custom_call.1} parent=1 // pred_fallthru
      _
    // Predicated region
    $region6: #{tpu_custom_call.1} parent=1 // pred_check
      _
    $region7: #{tpu_custom_call.1} parent=1 // pred_check_branch
      %44 = sbr.rel (0) target = $region9
    $region8: #{tpu_custom_call.1} parent=1 // pred_region
      %s46 = ssub.s32 512, 512
      %47 = vsyncadd [#allocation6], %s46
      %s48 = sshll.u32 [#allocation5], 4
      %s49 = int_to_ptr.vmem [resolvable:$true] %s48
      %54 = dma.hbm_to_vmem [thread:$0]  %s1, 512, %s49, [#allocation6], 128, 128, 8
    $region9: #{tpu_custom_call.1} parent=1 // pred_fallthru
      _
    // Predicated region
    $region10: #{tpu_custom_call.1} parent=1 // pred_check
      _
    $region11: #{tpu_custom_call.1} parent=1 // pred_check_branch
      %56 = sbr.rel (0) target = $region13
    $region12: #{tpu_custom_call.1} parent=1 // pred_region
      %s58 = ssub.s32 256, 256
      %59 = vsyncadd [#allocation6], %s58
      %s60 = sshll.u32 [#allocation7], 4
      %s61 = int_to_ptr.vmem [resolvable:$true] %s60
      %66 = dma.hbm_to_vmem [thread:$0]  %s2, 256, %s61, [#allocation6], 128, 128, 8
    $region13: #{tpu_custom_call.1} parent=1 // pred_fallthru
      _
    // Predicated region
    $region14: #{tpu_custom_call.1} parent=1 // pred_check
      _
    $region15: #{tpu_custom_call.1} parent=1 // pred_check_branch
      %68 = sbr.rel (0) target = $region17
    $region16: #{tpu_custom_call.1} parent=1 // pred_region
      %s70 = ssub.s32 512, 512
      %71 = vsyncadd [#allocation9], %s70
      %s72 = sshll.u32 [#allocation8], 4
      %s73 = int_to_ptr.vmem [resolvable:$true] %s72
      %78 = dma.hbm_to_vmem [thread:$0]  %s3, 512, %s73, [#allocation9], 128, 128, 8
    $region17: #{tpu_custom_call.1} parent=1 // pred_fallthru
      _
    // Predicated region
    $region18: #{tpu_custom_call.1} parent=1 // pred_check
      _
    $region19: #{tpu_custom_call.1} parent=1 // pred_check_branch
      %80 = sbr.rel (0) target = $region21
    $region20: #{tpu_custom_call.1} parent=1 // pred_region
      %s82 = ssub.s32 128, 128
      %83 = vsyncadd [#allocation9], %s82
      %s85 = sshll.u32 [#allocation10], 4
      %s86 = int_to_ptr.vmem [resolvable:$true] %s85
      %88 = dma.hbm_to_vmem [thread:$0]  %s4, 128, %s86, [#allocation9]
    $region21: #{tpu_custom_call.1} parent=1 // pred_fallthru
      _
    // Predicated region
    $region22: #{tpu_custom_call.1} parent=1 // pred_check
      _
    $region23: #{tpu_custom_call.1} parent=1 // pred_check_branch
      %90 = sbr.rel (0) target = $region25
    $region24: #{tpu_custom_call.1} parent=1 // pred_region
      _
    $region25: #{tpu_custom_call.1} parent=1 // pred_fallthru
      _
    // Predicated region
    $region26: #{tpu_custom_call.1} parent=1 // pred_check
      _
    $region27: #{tpu_custom_call.1} parent=1 // pred_check_branch
      %92 = sbr.rel (0) target = $region29
    $region28: #{tpu_custom_call.1} parent=1 // pred_region
      %s94 = ssub.s32 2048, 2048
      %95 = vsyncadd [#allocation12], %s94
      %s96 = sshll.u32 [#allocation11], 4
      %s97 = int_to_ptr.vmem [resolvable:$true] %s96
      %102 = dma.hbm_to_vmem [thread:$0]  %s6, 2048, %s97, [#allocation12], 128, 128, 8
    $region29: #{tpu_custom_call.1} parent=1 // pred_fallthru
      _
    // Predicated region
    $region30: #{tpu_custom_call.1} parent=1 // pred_check
      _
    $region31: #{tpu_custom_call.1} parent=1 // pred_check_branch
      %104 = sbr.rel (0) target = $region33
    $region32: #{tpu_custom_call.1} parent=1 // pred_region
      %s106 = ssub.s32 2048, 2048
      %107 = vsyncadd [#allocation12], %s106
      %s108 = sshll.u32 [#allocation13], 4
      %s109 = int_to_ptr.vmem [resolvable:$true] %s108
      %114 = dma.hbm_to_vmem [thread:$0]  %s7, 2048, %s109, [#allocation12], 128, 128, 8
    $region33: #{tpu_custom_call.1} parent=1 // pred_fallthru
      _
    // Predicated region
    $region34: #{tpu_custom_call.1} parent=1 // pred_check
      _
    $region35: #{tpu_custom_call.1} parent=1 // pred_check_branch
      %116 = sbr.rel (0) target = $region37
    $region36: #{tpu_custom_call.1} parent=1 // pred_region
      %s118 = ssub.s32 2048, 2048
      %119 = vsyncadd [#allocation15], %s118
      %s120 = sshll.u32 [#allocation14], 4
      %s121 = int_to_ptr.vmem [resolvable:$true] %s120
      %126 = dma.hbm_to_vmem [thread:$0]  %s8, 2048, %s121, [#allocation15], 128, 128, 8
    $region37: #{tpu_custom_call.1} parent=1 // pred_fallthru
      _
    // Predicated region
    $region38: #{tpu_custom_call.1} parent=1 // pred_check
      _
    $region39: #{tpu_custom_call.1} parent=1 // pred_check_branch
      %128 = sbr.rel (0) target = $region41
    $region40: #{tpu_custom_call.1} parent=1 // pred_region
      %s130 = ssub.s32 2048, 2048
      %131 = vsyncadd [#allocation15], %s130
      %s132 = sshll.u32 [#allocation16], 4
      %s133 = int_to_ptr.vmem [resolvable:$true] %s132
      %138 = dma.hbm_to_vmem [thread:$0]  %s9, 2048, %s133, [#allocation15], 128, 128, 8
    $region41: #{tpu_custom_call.1} parent=1 // pred_fallthru
      _
    // Predicated region
    $region42: #{tpu_custom_call.1} parent=1 // pred_check
      _
    $region43: #{tpu_custom_call.1} parent=1 // pred_check_branch
      %140 = sbr.rel (0) target = $region45
    $region44: #{tpu_custom_call.1} parent=1 // pred_region
      _
    $region45: #{tpu_custom_call.1} parent=1 // pred_fallthru
      _
    // Predicated region
    $region46: #{tpu_custom_call.1} parent=1 // pred_check
      _
    $region47: #{tpu_custom_call.1} parent=1 // pred_check_branch
      %142 = sbr.rel (0) target = $region49
    $region48: #{tpu_custom_call.1} parent=1 // pred_region
      %s144 = ssub.s32 2048, 2048
      %145 = vsyncadd [#allocation18], %s144
      %s146 = sshll.u32 [#allocation17], 4
      %s147 = int_to_ptr.vmem [resolvable:$true] %s146
      %152 = dma.hbm_to_vmem [thread:$0]  %s11, 2048, %s147, [#allocation18], 128, 128, 8
    $region49: #{tpu_custom_call.1} parent=1 // pred_fallthru
      _
    // Predicated region
    $region50: #{tpu_custom_call.1} parent=1 // pred_check
      _
    $region51: #{tpu_custom_call.1} parent=1 // pred_check_branch
      %154 = sbr.rel (0) target = $region53
    $region52: #{tpu_custom_call.1} parent=1 // pred_region
      %s156 = ssub.s32 2048, 2048
      %157 = vsyncadd [#allocation18], %s156
      %s158 = sshll.u32 [#allocation19], 4
      %s159 = int_to_ptr.vmem [resolvable:$true] %s158
      %164 = dma.hbm_to_vmem [thread:$0]  %s12, 2048, %s159, [#allocation18], 128, 128, 8
    $region53: #{tpu_custom_call.1} parent=1 // pred_fallthru
      _
    // Predicated region
    $region54: #{tpu_custom_call.1} parent=1 // pred_check
      _
    $region55: #{tpu_custom_call.1} parent=1 // pred_check_branch
      %166 = sbr.rel (0) target = $region57
    $region56: #{tpu_custom_call.1} parent=1 // pred_region
      _
    $region57: #{tpu_custom_call.1} parent=1 // pred_fallthru
      _
    // Predicated region
    $region58: #{tpu_custom_call.1} parent=1 // pred_check
      _
    $region59: #{tpu_custom_call.1} parent=1 // pred_check_branch
      %168 = sbr.rel (0) target = $region61
    $region60: #{tpu_custom_call.1} parent=1 // pred_region
      %s170 = ssub.s32 2048, 2048
      %171 = vsyncadd [#allocation21], %s170
      %s172 = sshll.u32 [#allocation20], 4
      %s173 = int_to_ptr.vmem [resolvable:$true] %s172
      %178 = dma.hbm_to_vmem [thread:$0]  %s14, 2048, %s173, [#allocation21], 128, 128, 8
    $region61: #{tpu_custom_call.1} parent=1 // pred_fallthru
      _
    // Predicated region
    $region62: #{tpu_custom_call.1} parent=1 // pred_check
      _
    $region63: #{tpu_custom_call.1} parent=1 // pred_check_branch
      %180 = sbr.rel (0) target = $region65
    $region64: #{tpu_custom_call.1} parent=1 // pred_region
      _
    $region65: #{tpu_custom_call.1} parent=1 // pred_fallthru
      _
    // Predicated region
    $region66: #{tpu_custom_call.1} parent=1 // pred_check
      _
    $region67: #{tpu_custom_call.1} parent=1 // pred_check_branch
      %182 = sbr.rel (0) target = $region69
    $region68: #{tpu_custom_call.1} parent=1 // pred_region
      %s184 = ssub.s32 2048, 2048
      %185 = vsyncadd [#allocation21], %s184
      %s186 = sshll.u32 [#allocation22], 4
      %s187 = int_to_ptr.vmem [resolvable:$true] %s186
      %192 = dma.hbm_to_vmem [thread:$0]  %s16, 2048, %s187, [#allocation21], 128, 128, 8
    $region69: #{tpu_custom_call.1} parent=1 // pred_fallthru
      _
    // Predicated region
    $region70: #{tpu_custom_call.1} parent=1 // pred_check
      _
    $region71: #{tpu_custom_call.1} parent=1 // pred_check_branch
      %194 = sbr.rel (0) target = $region73
    $region72: #{tpu_custom_call.1} parent=1 // pred_region
      _
    $region73: #{tpu_custom_call.1} parent=1 // pred_fallthru
      _
    // Predicated region
    $region74: #{tpu_custom_call.1} parent=1 // pred_check
      _
    $region75: #{tpu_custom_call.1} parent=1 // pred_check_branch
      %196 = sbr.rel (0) target = $region77
    $region76: #{tpu_custom_call.1} parent=1 // pred_region
      %197 = dma.done [#allocation3], 256
    $region77: #{tpu_custom_call.1} parent=1 // pred_fallthru
      _
    // Predicated region
    $region78: #{tpu_custom_call.1} parent=1 // pred_check
      _
    $region79: #{tpu_custom_call.1} parent=1 // pred_check_branch
      %199 = sbr.rel (0) target = $region81
    $region80: #{tpu_custom_call.1} parent=1 // pred_region
      %200 = dma.done [#allocation6], 512
    $region81: #{tpu_custom_call.1} parent=1 // pred_fallthru
      _
    // Predicated region
    $region82: #{tpu_custom_call.1} parent=1 // pred_check
      _
    $region83: #{tpu_custom_call.1} parent=1 // pred_check_branch
      %202 = sbr.rel (0) target = $region85
    $region84: #{tpu_custom_call.1} parent=1 // pred_region
      %203 = dma.done [#allocation6], 256
    $region85: #{tpu_custom_call.1} parent=1 // pred_fallthru
      _
    // Predicated region
    $region86: #{tpu_custom_call.1} parent=1 // pred_check
      _
    $region87: #{tpu_custom_call.1} parent=1 // pred_check_branch
      %205 = sbr.rel (0) target = $region89
    $region88: #{tpu_custom_call.1} parent=1 // pred_region
      %206 = dma.done [#allocation9], 512
    $region89: #{tpu_custom_call.1} parent=1 // pred_fallthru
      _
    // Predicated region
    $region90: #{tpu_custom_call.1} parent=1 // pred_check
      _
    $region91: #{tpu_custom_call.1} parent=1 // pred_check_branch
      %208 = sbr.rel (0) target = $region93
    $region92: #{tpu_custom_call.1} parent=1 // pred_region
      %209 = dma.done [#allocation9], 128
    $region93: #{tpu_custom_call.1} parent=1 // pred_fallthru
      _
    // Predicated region
    $region94: #{tpu_custom_call.1} parent=1 // pred_check
      _
    $region95: #{tpu_custom_call.1} parent=1 // pred_check_branch
      %211 = sbr.rel (0) target = $region97
    $region96: #{tpu_custom_call.1} parent=1 // pred_region
      %212 = dma.done [#allocation12], 2048
    $region97: #{tpu_custom_call.1} parent=1 // pred_fallthru
      _
    // Predicated region
    $region98: #{tpu_custom_call.1} parent=1 // pred_check
      _
    $region99: #{tpu_custom_call.1} parent=1 // pred_check_branch
      %214 = sbr.rel (0) target = $region101
    $region100: #{tpu_custom_call.1} parent=1 // pred_region
      %215 = dma.done [#allocation12], 2048
    $region101: #{tpu_custom_call.1} parent=1 // pred_fallthru
      _
    // Predicated region
    $region102: #{tpu_custom_call.1} parent=1 // pred_check
      _
    $region103: #{tpu_custom_call.1} parent=1 // pred_check_branch
      %217 = sbr.rel (0) target = $region105
    $region104: #{tpu_custom_call.1} parent=1 // pred_region
      %218 = dma.done [#allocation15], 2048
    $region105: #{tpu_custom_call.1} parent=1 // pred_fallthru
      _
    // Predicated region
    $region106: #{tpu_custom_call.1} parent=1 // pred_check
      _
    $region107: #{tpu_custom_call.1} parent=1 // pred_check_branch
      %220 = sbr.rel (0) target = $region109
    $region108: #{tpu_custom_call.1} parent=1 // pred_region
      %221 = dma.done [#allocation15], 2048
    $region109: #{tpu_custom_call.1} parent=1 // pred_fallthru
      _
    // Predicated region
    $region110: #{tpu_custom_call.1} parent=1 // pred_check
      _
    $region111: #{tpu_custom_call.1} parent=1 // pred_check_branch
      %223 = sbr.rel (0) target = $region113
    $region112: #{tpu_custom_call.1} parent=1 // pred_region
      %224 = dma.done [#allocation18], 2048
    $region113: #{tpu_custom_call.1} parent=1 // pred_fallthru
      _
    // Predicated region
    $region114: #{tpu_custom_call.1} parent=1 // pred_check
      _
    $region115: #{tpu_custom_call.1} parent=1 // pred_check_branch
      %226 = sbr.rel (0) target = $region117
    $region116: #{tpu_custom_call.1} parent=1 // pred_region
      %227 = dma.done [#allocation18], 2048
    $region117: #{tpu_custom_call.1} parent=1 // pred_fallthru
      _
    // Predicated region
    $region118: #{tpu_custom_call.1} parent=1 // pred_check
      _
    $region119: #{tpu_custom_call.1} parent=1 // pred_check_branch
      %229 = sbr.rel (0) target = $region121
    $region120: #{tpu_custom_call.1} parent=1 // pred_region
      %230 = dma.done [#allocation21], 2048
    $region121: #{tpu_custom_call.1} parent=1 // pred_fallthru
      _
    // Predicated region
    $region122: #{tpu_custom_call.1} parent=1 // pred_check
      _
    $region123: #{tpu_custom_call.1} parent=1 // pred_check_branch
      %232 = sbr.rel (0) target = $region125
    $region124: #{tpu_custom_call.1} parent=1 // pred_region
      %233 = dma.done [#allocation21], 2048
    $region125: #{tpu_custom_call.1} parent=1 // pred_fallthru
      _
    %v234 = vld [vmem:[#allocation7] sm:$0xff]
    %v235 = vld [vmem:[#allocation7 + $0x8] sm:$0xff]
    %v236 = vld [vmem:[#allocation8] sm:$0xff]
    %v237 = vld [vmem:[#allocation8 + $0x8] sm:$0xff]
    %v238 = vld [vmem:[#allocation8 + $0x10] sm:$0xff]
    %v239 = vld [vmem:[#allocation8 + $0x18] sm:$0xff]
    %v240 = vld [vmem:[#allocation13] sm:$0xff]
    %v241 = vld [vmem:[#allocation13 + $0x8] sm:$0xff]
    %v242 = vld [vmem:[#allocation13 + $0x10] sm:$0xff]
    %v243 = vld [vmem:[#allocation13 + $0x18] sm:$0xff]
    %v244 = vld [vmem:[#allocation13 + $0x20] sm:$0xff]
    %v245 = vld [vmem:[#allocation13 + $0x28] sm:$0xff]
    %v246 = vld [vmem:[#allocation13 + $0x30] sm:$0xff]
    %v247 = vld [vmem:[#allocation13 + $0x38] sm:$0xff]
    %v248 = vld [vmem:[#allocation13 + $0x40] sm:$0xff]
    %v249 = vld [vmem:[#allocation13 + $0x48] sm:$0xff]
    %v250 = vld [vmem:[#allocation13 + $0x50] sm:$0xff]
    %v251 = vld [vmem:[#allocation13 + $0x58] sm:$0xff]
    %v252 = vld [vmem:[#allocation13 + $0x60] sm:$0xff]
    %v253 = vld [vmem:[#allocation13 + $0x68] sm:$0xff]
    %v254 = vld [vmem:[#allocation13 + $0x70] sm:$0xff]
    %v255 = vld [vmem:[#allocation13 + $0x78] sm:$0xff]
    %v256 = vld [vmem:[#allocation5] sm:$0xff]
    %v257 = vld [vmem:[#allocation5 + $0x8] sm:$0xff]
    %v258 = vld [vmem:[#allocation5 + $0x10] sm:$0xff]
    %v259 = vld [vmem:[#allocation5 + $0x18] sm:$0xff]
    %v260 = vld [vmem:[#allocation11] sm:$0xff]
    %v261 = vld [vmem:[#allocation11 + $0x8] sm:$0xff]
    %v262 = vld [vmem:[#allocation11 + $0x10] sm:$0xff]
    %v263 = vld [vmem:[#allocation11 + $0x18] sm:$0xff]
    %v264 = vld [vmem:[#allocation11 + $0x20] sm:$0xff]
    %v265 = vld [vmem:[#allocation11 + $0x28] sm:$0xff]
    %v266 = vld [vmem:[#allocation11 + $0x30] sm:$0xff]
    %v267 = vld [vmem:[#allocation11 + $0x38] sm:$0xff]
    %v268 = vld [vmem:[#allocation11 + $0x40] sm:$0xff]
    %v269 = vld [vmem:[#allocation11 + $0x48] sm:$0xff]
    %v270 = vld [vmem:[#allocation11 + $0x50] sm:$0xff]
    %v271 = vld [vmem:[#allocation11 + $0x58] sm:$0xff]
    %v272 = vld [vmem:[#allocation11 + $0x60] sm:$0xff]
    %v273 = vld [vmem:[#allocation11 + $0x68] sm:$0xff]
    %v274 = vld [vmem:[#allocation11 + $0x70] sm:$0xff]
    %v275 = vld [vmem:[#allocation11 + $0x78] sm:$0xff]
    %276 = vmatprep.subr.mxu0 0.0
    %277 = vmatpush1.msra.mxu0 %v275
    %278 = vmatprep.subr.mxu0 0.0
    %279 = vmatpush1.msra.mxu0 %v274
    %280 = vmatprep.subr.mxu0 0.0
    %281 = vmatpush1.msra.mxu0 %v273
    %282 = vmatprep.subr.mxu0 0.0
    %283 = vmatpush1.msra.mxu0 %v272
    %284 = vmatprep.subr.mxu0 0.0
    %285 = vmatpush1.msra.mxu0 %v271
    %286 = vmatprep.subr.mxu0 0.0
    %287 = vmatpush1.msra.mxu0 %v270
    %288 = vmatprep.subr.mxu0 0.0
    %289 = vmatpush1.msra.mxu0 %v269
    %290 = vmatprep.subr.mxu0 0.0
    %291 = vmatpush1.msra.mxu0 %v268
    %292 = vmatprep.subr.mxu0 0.0
    %293 = vmatpush1.msra.mxu0 %v267
    %294 = vmatprep.subr.mxu0 0.0
    %295 = vmatpush1.msra.mxu0 %v266
    %296 = vmatprep.subr.mxu0 0.0
    %297 = vmatpush1.msra.mxu0 %v265
    %298 = vmatprep.subr.mxu0 0.0
    %299 = vmatpush1.msra.mxu0 %v264
    %300 = vmatprep.subr.mxu0 0.0
    %301 = vmatpush1.msra.mxu0 %v263
    %302 = vmatprep.subr.mxu0 0.0
    %303 = vmatpush1.msra.mxu0 %v262
    %304 = vmatprep.subr.mxu0 0.0
    %305 = vmatpush1.msra.mxu0 %v261
    %306 = vmatprep.subr.mxu0 0.0
    %307 = vmatpush1.msra.mxu0 %v260
    %308 = vmatprep.subr.mxu0 0.0
    %309 = vmatpush2.msra.mxu0 0.0
    %310 = vmatprep.subr.mxu0 0.0
    %311 = vmatpush2.msra.mxu0 0.0
    %312 = vmatprep.subr.mxu0 0.0
    %313 = vmatpush2.msra.mxu0 0.0
    %314 = vmatprep.subr.mxu0 0.0
    %315 = vmatpush2.msra.mxu0 0.0
    %316 = vmatprep.subr.mxu0 0.0
    %317 = vmatpush2.msra.mxu0 0.0
    %318 = vmatprep.subr.mxu0 0.0
    %319 = vmatpush2.msra.mxu0 0.0
    %320 = vmatprep.subr.mxu0 0.0
    %321 = vmatpush2.msra.mxu0 0.0
    %322 = vmatprep.subr.mxu0 0.0
    %323 = vmatpush2.msra.mxu0 0.0
    %324 = vmatprep.subr.mxu0 0.0
    %325 = vmatpush2.msra.mxu0 0.0
    %326 = vmatprep.subr.mxu0 0.0
    %327 = vmatpush2.msra.mxu0 0.0
    %328 = vmatprep.subr.mxu0 0.0
    %329 = vmatpush2.msra.mxu0 0.0
    %330 = vmatprep.subr.mxu0 0.0
    %331 = vmatpush2.msra.mxu0 0.0
    %332 = vmatprep.subr.mxu0 0.0
    %333 = vmatpush2.msra.mxu0 0.0
    %334 = vmatprep.subr.mxu0 0.0
    %335 = vmatpush2.msra.mxu0 0.0
    %336 = vmatprep.subr.mxu0 0.0
    %337 = vmatpush2.msra.mxu0 0.0
    %338 = vmatprep.subr.mxu0 0.0
    %339 = vmatpush2.msra.mxu0 0.0
    %340 = vmatprep.mubr.f32.mxu0 0.0
    %341 = vmatmul.mubr.f32.gmra.mxu0 %v256
    %v342 = vpop.f32.mrf.mxu0
    %v343 = vadd.f32 0.0, %v342
    %v344 = vpop.f32.mrf.mxu0
    %345 = vmatprep.mubr.f32.mxu0 0.0
    %346 = vmatmul.mubr.f32.gmra.mxu0 %v257
    %v347 = vpop.f32.mrf.mxu0
    %v348 = vadd.f32 0.0, %v347
    %v349 = vpop.f32.mrf.mxu0
    %350 = vmatprep.mubr.f32.mxu0 0.0
    %351 = vmatmul.mubr.f32.gmra.mxu0 %v258
    %v352 = vpop.f32.mrf.mxu0
    %v353 = vadd.f32 0.0, %v352
    %v354 = vpop.f32.mrf.mxu0
    %355 = vmatprep.mubr.f32.mxu0 0.0
    %356 = vmatmul.mubr.f32.gmra.mxu0 %v259
    %v357 = vpop.f32.mrf.mxu0
    %v358 = vadd.f32 0.0, %v357
    %v359 = vpop.f32.mrf.mxu0
    %360 = vdwg.mxu0
    %v361 = vmax.f32 %v343, 0.0
    %v362 = vmax.f32 %v348, 0.0
    %v363 = vmax.f32 %v353, 0.0
    %v364 = vmax.f32 %v358, 0.0
    %vm365 = vcmask 261120
    %v367 = vsel %vm365, %v236, 0
    %v370 = vsel %vm365, %v237, 0
    %v373 = vsel %vm365, %v238, 0
    %v376 = vsel %vm365, %v239, 0
    %378 = vmatprep.subr.mxu0 0.0
    %379 = vmatpush1.msra.mxu0 0.0
    %380 = vmatprep.subr.mxu0 0.0
    %381 = vmatpush1.msra.mxu0 0.0
    %382 = vmatprep.subr.mxu0 0.0
    %383 = vmatpush1.msra.mxu0 0.0
    %384 = vmatprep.subr.mxu0 0.0
    %385 = vmatpush1.msra.mxu0 0.0
    %386 = vmatprep.subr.mxu0 0.0
    %387 = vmatpush1.msra.mxu0 0.0
    %388 = vmatprep.subr.mxu0 0.0
    %389 = vmatpush1.msra.mxu0 0.0
    %390 = vmatprep.subr.mxu0 0.0
    %391 = vmatpush1.msra.mxu0 0.0
    %392 = vmatprep.subr.mxu0 0.0
    %393 = vmatpush1.msra.mxu0 0.0
    %394 = vmatprep.subr.mxu0 0.0
    %395 = vmatpush1.msra.mxu0 0.0
    %396 = vmatprep.subr.mxu0 0.0
    %397 = vmatpush1.msra.mxu0 0.0
    %398 = vmatprep.subr.mxu0 0.0
    %399 = vmatpush1.msra.mxu0 0.0
    %400 = vmatprep.subr.mxu0 0.0
    %401 = vmatpush1.msra.mxu0 0.0
    %402 = vmatprep.subr.mxu0 0.0
    %403 = vmatpush1.msra.mxu0 %v364
    %404 = vmatprep.subr.mxu0 0.0
    %405 = vmatpush1.msra.mxu0 %v363
    %406 = vmatprep.subr.mxu0 0.0
    %407 = vmatpush1.msra.mxu0 %v362
    %408 = vmatprep.subr.mxu0 0.0
    %409 = vmatpush1.msra.mxu0 %v361
    %410 = vmatprep.subr.mxu0 0.0
    %411 = vmatpush2.msra.mxu0 0.0
    %412 = vmatprep.subr.mxu0 0.0
    %413 = vmatpush2.msra.mxu0 0.0
    %414 = vmatprep.subr.mxu0 0.0
    %415 = vmatpush2.msra.mxu0 0.0
    %416 = vmatprep.subr.mxu0 0.0
    %417 = vmatpush2.msra.mxu0 0.0
    %418 = vmatprep.subr.mxu0 0.0
    %419 = vmatpush2.msra.mxu0 0.0
    %420 = vmatprep.subr.mxu0 0.0
    %421 = vmatpush2.msra.mxu0 0.0
    %422 = vmatprep.subr.mxu0 0.0
    %423 = vmatpush2.msra.mxu0 0.0
    %424 = vmatprep.subr.mxu0 0.0
    %425 = vmatpush2.msra.mxu0 0.0
    %426 = vmatprep.subr.mxu0 0.0
    %427 = vmatpush2.msra.mxu0 0.0
    %428 = vmatprep.subr.mxu0 0.0
    %429 = vmatpush2.msra.mxu0 0.0
    %430 = vmatprep.subr.mxu0 0.0
    %431 = vmatpush2.msra.mxu0 0.0
    %432 = vmatprep.subr.mxu0 0.0
    %433 = vmatpush2.msra.mxu0 0.0
    %434 = vmatprep.subr.mxu0 0.0
    %435 = vmatpush2.msra.mxu0 0.0
    %436 = vmatprep.subr.mxu0 0.0
    %437 = vmatpush2.msra.mxu0 0.0
    %438 = vmatprep.subr.mxu0 0.0
    %439 = vmatpush2.msra.mxu0 0.0
    %440 = vmatprep.subr.mxu0 0.0
    %441 = vmatpush2.msra.mxu0 0.0
    %442 = vmatprep.mubr.f32.mxu0 0.0
    %443 = vmatmul.mubr.f32.gmra.mxu0 %v367
    %v444 = vpop.f32.mrf.mxu0
    %v445 = vadd.f32 0.0, %v444
    %v446 = vpop.f32.mrf.mxu0
    %447 = vmatprep.mubr.f32.mxu0 0.0
    %448 = vmatmul.mubr.f32.gmra.mxu0 %v370
    %v449 = vpop.f32.mrf.mxu0
    %v450 = vadd.f32 0.0, %v449
    %v451 = vpop.f32.mrf.mxu0
    %452 = vmatprep.mubr.f32.mxu0 0.0
    %453 = vmatmul.mubr.f32.gmra.mxu0 %v373
    %v454 = vpop.f32.mrf.mxu0
    %v455 = vadd.f32 0.0, %v454
    %v456 = vpop.f32.mrf.mxu0
    %457 = vmatprep.mubr.f32.mxu0 0.0
    %458 = vmatmul.mubr.f32.gmra.mxu0 %v376
    %v459 = vpop.f32.mrf.mxu0
    %v460 = vadd.f32 0.0, %v459
    %v461 = vpop.f32.mrf.mxu0
    %462 = vdwg.mxu0
    %463 = vmatprep.subr.mxu0 0.0
    %464 = vmatpush1.msra.mxu0 %v255
    %465 = vmatprep.subr.mxu0 0.0
    %466 = vmatpush1.msra.mxu0 %v254
    %467 = vmatprep.subr.mxu0 0.0
    %468 = vmatpush1.msra.mxu0 %v253
    %469 = vmatprep.subr.mxu0 0.0
    %470 = vmatpush1.msra.mxu0 %v252
    %471 = vmatprep.subr.mxu0 0.0
    %472 = vmatpush1.msra.mxu0 %v251
    %473 = vmatprep.subr.mxu0 0.0
    %474 = vmatpush1.msra.mxu0 %v250
    %475 = vmatprep.subr.mxu0 0.0
    %476 = vmatpush1.msra.mxu0 %v249
    %477 = vmatprep.subr.mxu0 0.0
    %478 = vmatpush1.msra.mxu0 %v248
    %479 = vmatprep.subr.mxu0 0.0
    %480 = vmatpush1.msra.mxu0 %v247
    %481 = vmatprep.subr.mxu0 0.0
    %482 = vmatpush1.msra.mxu0 %v246
    %483 = vmatprep.subr.mxu0 0.0
    %484 = vmatpush1.msra.mxu0 %v245
    %485 = vmatprep.subr.mxu0 0.0
    %486 = vmatpush1.msra.mxu0 %v244
    %487 = vmatprep.subr.mxu0 0.0
    %488 = vmatpush1.msra.mxu0 %v243
    %489 = vmatprep.subr.mxu0 0.0
    %490 = vmatpush1.msra.mxu0 %v242
    %491 = vmatprep.subr.mxu0 0.0
    %492 = vmatpush1.msra.mxu0 %v241
    %493 = vmatprep.subr.mxu0 0.0
    %494 = vmatpush1.msra.mxu0 %v240
    %495 = vmatprep.subr.mxu0 0.0
    %496 = vmatpush2.msra.mxu0 0.0
    %497 = vmatprep.subr.mxu0 0.0
    %498 = vmatpush2.msra.mxu0 0.0
    %499 = vmatprep.subr.mxu0 0.0
    %500 = vmatpush2.msra.mxu0 0.0
    %501 = vmatprep.subr.mxu0 0.0
    %502 = vmatpush2.msra.mxu0 0.0
    %503 = vmatprep.subr.mxu0 0.0
    %504 = vmatpush2.msra.mxu0 0.0
    %505 = vmatprep.subr.mxu0 0.0
    %506 = vmatpush2.msra.mxu0 0.0
    %507 = vmatprep.subr.mxu0 0.0
    %508 = vmatpush2.msra.mxu0 0.0
    %509 = vmatprep.subr.mxu0 0.0
    %510 = vmatpush2.msra.mxu0 0.0
    %511 = vmatprep.subr.mxu0 0.0
    %512 = vmatpush2.msra.mxu0 0.0
    %513 = vmatprep.subr.mxu0 0.0
    %514 = vmatpush2.msra.mxu0 0.0
    %515 = vmatprep.subr.mxu0 0.0
    %516 = vmatpush2.msra.mxu0 0.0
    %517 = vmatprep.subr.mxu0 0.0
    %518 = vmatpush2.msra.mxu0 0.0
    %519 = vmatprep.subr.mxu0 0.0
    %520 = vmatpush2.msra.mxu0 0.0
    %521 = vmatprep.subr.mxu0 0.0
    %522 = vmatpush2.msra.mxu0 0.0
    %523 = vmatprep.subr.mxu0 0.0
    %524 = vmatpush2.msra.mxu0 0.0
    %525 = vmatprep.subr.mxu0 0.0
    %526 = vmatpush2.msra.mxu0 0.0
    %527 = vmatprep.mubr.f32.mxu0 0.0
    %528 = vmatmul.mubr.f32.gmra.mxu0 %v445
    %v529 = vpop.f32.mrf.mxu0
    %v530 = vadd.f32 0.0, %v529
    %v531 = vpop.f32.mrf.mxu0
    %532 = vmatprep.mubr.f32.mxu0 0.0
    %533 = vmatmul.mubr.f32.gmra.mxu0 %v450
    %v534 = vpop.f32.mrf.mxu0
    %v535 = vadd.f32 0.0, %v534
    %v536 = vpop.f32.mrf.mxu0
    %537 = vmatprep.mubr.f32.mxu0 0.0
    %538 = vmatmul.mubr.f32.gmra.mxu0 %v455
    %v539 = vpop.f32.mrf.mxu0
    %v540 = vadd.f32 0.0, %v539
    %v541 = vpop.f32.mrf.mxu0
    %542 = vmatprep.mubr.f32.mxu0 0.0
    %543 = vmatmul.mubr.f32.gmra.mxu0 %v460
    %v544 = vpop.f32.mrf.mxu0
    %v545 = vadd.f32 0.0, %v544
    %v546 = vpop.f32.mrf.mxu0
    %547 = vdwg.mxu0
    %v548 = vadd.f32 %v343, %v530
    %v549 = vadd.f32 %v348, %v535
    %v550 = vadd.f32 %v353, %v540
    %v551 = vadd.f32 %v358, %v545
    %v552 = vmax.f32 %v548, 0.0
    %v553 = vmax.f32 %v549, 0.0
    %v554 = vmax.f32 %v550, 0.0
    %v555 = vmax.f32 %v551, 0.0
    %556 = vmatprep.subr.mxu0 0.0
    %557 = vmatpush1.msra.mxu0 0.0
    %558 = vmatprep.subr.mxu0 0.0
    %559 = vmatpush1.msra.mxu0 0.0
    %560 = vmatprep.subr.mxu0 0.0
    %561 = vmatpush1.msra.mxu0 0.0
    %562 = vmatprep.subr.mxu0 0.0
    %563 = vmatpush1.msra.mxu0 0.0
    %564 = vmatprep.subr.mxu0 0.0
    %565 = vmatpush1.msra.mxu0 0.0
    %566 = vmatprep.subr.mxu0 0.0
    %567 = vmatpush1.msra.mxu0 0.0
    %568 = vmatprep.subr.mxu0 0.0
    %569 = vmatpush1.msra.mxu0 0.0
    %570 = vmatprep.subr.mxu0 0.0
    %571 = vmatpush1.msra.mxu0 0.0
    %572 = vmatprep.subr.mxu0 0.0
    %573 = vmatpush1.msra.mxu0 0.0
    %574 = vmatprep.subr.mxu0 0.0
    %575 = vmatpush1.msra.mxu0 0.0
    %576 = vmatprep.subr.mxu0 0.0
    %577 = vmatpush1.msra.mxu0 0.0
    %578 = vmatprep.subr.mxu0 0.0
    %579 = vmatpush1.msra.mxu0 0.0
    %580 = vmatprep.subr.mxu0 0.0
    %581 = vmatpush1.msra.mxu0 %v555
    %582 = vmatprep.subr.mxu0 0.0
    %583 = vmatpush1.msra.mxu0 %v554
    %584 = vmatprep.subr.mxu0 0.0
    %585 = vmatpush1.msra.mxu0 %v553
    %586 = vmatprep.subr.mxu0 0.0
    %587 = vmatpush1.msra.mxu0 %v552
    %588 = vmatprep.subr.mxu0 0.0
    %589 = vmatpush2.msra.mxu0 0.0
    %590 = vmatprep.subr.mxu0 0.0
    %591 = vmatpush2.msra.mxu0 0.0
    %592 = vmatprep.subr.mxu0 0.0
    %593 = vmatpush2.msra.mxu0 0.0
    %594 = vmatprep.subr.mxu0 0.0
    %595 = vmatpush2.msra.mxu0 0.0
    %596 = vmatprep.subr.mxu0 0.0
    %597 = vmatpush2.msra.mxu0 0.0
    %598 = vmatprep.subr.mxu0 0.0
    %599 = vmatpush2.msra.mxu0 0.0
    %600 = vmatprep.subr.mxu0 0.0
    %601 = vmatpush2.msra.mxu0 0.0
    %602 = vmatprep.subr.mxu0 0.0
    %603 = vmatpush2.msra.mxu0 0.0
    %604 = vmatprep.subr.mxu0 0.0
    %605 = vmatpush2.msra.mxu0 0.0
    %606 = vmatprep.subr.mxu0 0.0
    %607 = vmatpush2.msra.mxu0 0.0
    %608 = vmatprep.subr.mxu0 0.0
    %609 = vmatpush2.msra.mxu0 0.0
    %610 = vmatprep.subr.mxu0 0.0
    %611 = vmatpush2.msra.mxu0 0.0
    %612 = vmatprep.subr.mxu0 0.0
    %613 = vmatpush2.msra.mxu0 0.0
    %614 = vmatprep.subr.mxu0 0.0
    %615 = vmatpush2.msra.mxu0 0.0
    %616 = vmatprep.subr.mxu0 0.0
    %617 = vmatpush2.msra.mxu0 0.0
    %618 = vmatprep.subr.mxu0 0.0
    %619 = vmatpush2.msra.mxu0 0.0
    %620 = vmatprep.mubr.f32.mxu0 0.0
    %621 = vmatmul.mubr.f32.gmra.mxu0 %v367
    %v622 = vpop.f32.mrf.mxu0
    %v623 = vadd.f32 0.0, %v622
    %v624 = vpop.f32.mrf.mxu0
    %625 = vmatprep.mubr.f32.mxu0 0.0
    %626 = vmatmul.mubr.f32.gmra.mxu0 %v370
    %v627 = vpop.f32.mrf.mxu0
    %v628 = vadd.f32 0.0, %v627
    %v629 = vpop.f32.mrf.mxu0
    %630 = vmatprep.mubr.f32.mxu0 0.0
    %631 = vmatmul.mubr.f32.gmra.mxu0 %v373
    %v632 = vpop.f32.mrf.mxu0
    %v633 = vadd.f32 0.0, %v632
    %v634 = vpop.f32.mrf.mxu0
    %635 = vmatprep.mubr.f32.mxu0 0.0
    %636 = vmatmul.mubr.f32.gmra.mxu0 %v376
    %v637 = vpop.f32.mrf.mxu0
    %v638 = vadd.f32 0.0, %v637
    %v639 = vpop.f32.mrf.mxu0
    %640 = vdwg.mxu0
    %641 = vmatprep.subr.mxu0 0.0
    %642 = vmatpush1.msra.mxu0 %v255
    %643 = vmatprep.subr.mxu0 0.0
    %644 = vmatpush1.msra.mxu0 %v254
    %645 = vmatprep.subr.mxu0 0.0
    %646 = vmatpush1.msra.mxu0 %v253
    %647 = vmatprep.subr.mxu0 0.0
    %648 = vmatpush1.msra.mxu0 %v252
    %649 = vmatprep.subr.mxu0 0.0
    %650 = vmatpush1.msra.mxu0 %v251
    %651 = vmatprep.subr.mxu0 0.0
    %652 = vmatpush1.msra.mxu0 %v250
    %653 = vmatprep.subr.mxu0 0.0
    %654 = vmatpush1.msra.mxu0 %v249
    %655 = vmatprep.subr.mxu0 0.0
    %656 = vmatpush1.msra.mxu0 %v248
    %657 = vmatprep.subr.mxu0 0.0
    %658 = vmatpush1.msra.mxu0 %v247
    %659 = vmatprep.subr.mxu0 0.0
    %660 = vmatpush1.msra.mxu0 %v246
    %661 = vmatprep.subr.mxu0 0.0
    %662 = vmatpush1.msra.mxu0 %v245
    %663 = vmatprep.subr.mxu0 0.0
    %664 = vmatpush1.msra.mxu0 %v244
    %665 = vmatprep.subr.mxu0 0.0
    %666 = vmatpush1.msra.mxu0 %v243
    %667 = vmatprep.subr.mxu0 0.0
    %668 = vmatpush1.msra.mxu0 %v242
    %669 = vmatprep.subr.mxu0 0.0
    %670 = vmatpush1.msra.mxu0 %v241
    %671 = vmatprep.subr.mxu0 0.0
    %672 = vmatpush1.msra.mxu0 %v240
    %673 = vmatprep.subr.mxu0 0.0
    %674 = vmatpush2.msra.mxu0 0.0
    %675 = vmatprep.subr.mxu0 0.0
    %676 = vmatpush2.msra.mxu0 0.0
    %677 = vmatprep.subr.mxu0 0.0
    %678 = vmatpush2.msra.mxu0 0.0
    %679 = vmatprep.subr.mxu0 0.0
    %680 = vmatpush2.msra.mxu0 0.0
    %681 = vmatprep.subr.mxu0 0.0
    %682 = vmatpush2.msra.mxu0 0.0
    %683 = vmatprep.subr.mxu0 0.0
    %684 = vmatpush2.msra.mxu0 0.0
    %685 = vmatprep.subr.mxu0 0.0
    %686 = vmatpush2.msra.mxu0 0.0
    %687 = vmatprep.subr.mxu0 0.0
    %688 = vmatpush2.msra.mxu0 0.0
    %689 = vmatprep.subr.mxu0 0.0
    %690 = vmatpush2.msra.mxu0 0.0
    %691 = vmatprep.subr.mxu0 0.0
    %692 = vmatpush2.msra.mxu0 0.0
    %693 = vmatprep.subr.mxu0 0.0
    %694 = vmatpush2.msra.mxu0 0.0
    %695 = vmatprep.subr.mxu0 0.0
    %696 = vmatpush2.msra.mxu0 0.0
    %697 = vmatprep.subr.mxu0 0.0
    %698 = vmatpush2.msra.mxu0 0.0
    %699 = vmatprep.subr.mxu0 0.0
    %700 = vmatpush2.msra.mxu0 0.0
    %701 = vmatprep.subr.mxu0 0.0
    %702 = vmatpush2.msra.mxu0 0.0
    %703 = vmatprep.subr.mxu0 0.0
    %704 = vmatpush2.msra.mxu0 0.0
    %705 = vmatprep.mubr.f32.mxu0 0.0
    %706 = vmatmul.mubr.f32.gmra.mxu0 %v623
    %v707 = vpop.f32.mrf.mxu0
    %v708 = vadd.f32 0.0, %v707
    %v709 = vpop.f32.mrf.mxu0
    %710 = vmatprep.mubr.f32.mxu0 0.0
    %711 = vmatmul.mubr.f32.gmra.mxu0 %v628
    %v712 = vpop.f32.mrf.mxu0
    %v713 = vadd.f32 0.0, %v712
    %v714 = vpop.f32.mrf.mxu0
    %715 = vmatprep.mubr.f32.mxu0 0.0
    %716 = vmatmul.mubr.f32.gmra.mxu0 %v633
    %v717 = vpop.f32.mrf.mxu0
    %v718 = vadd.f32 0.0, %v717
    %v719 = vpop.f32.mrf.mxu0
    %720 = vmatprep.mubr.f32.mxu0 0.0
    %721 = vmatmul.mubr.f32.gmra.mxu0 %v638
    %v722 = vpop.f32.mrf.mxu0
    %v723 = vadd.f32 0.0, %v722
    %v724 = vpop.f32.mrf.mxu0
    %725 = vdwg.mxu0
    %v726 = vadd.f32 %v343, %v708
    %v727 = vadd.f32 %v348, %v713
    %v728 = vadd.f32 %v353, %v718
    %v729 = vadd.f32 %v358, %v723
    %v730 = vmax.f32 %v726, 0.0
    %v731 = vmax.f32 %v727, 0.0
    %v732 = vmax.f32 %v728, 0.0
    %v733 = vmax.f32 %v729, 0.0
    %v735 = vsel %vm365, %v234, 0
    %v738 = vsel %vm365, %v235, 0
    %740 = vmatprep.subr.mxu0 0.0
    %741 = vmatpush1.msra.mxu0 0.0
    %742 = vmatprep.subr.mxu0 0.0
    %743 = vmatpush1.msra.mxu0 0.0
    %744 = vmatprep.subr.mxu0 0.0
    %745 = vmatpush1.msra.mxu0 0.0
    %746 = vmatprep.subr.mxu0 0.0
    %747 = vmatpush1.msra.mxu0 0.0
    %748 = vmatprep.subr.mxu0 0.0
    %749 = vmatpush1.msra.mxu0 0.0
    %750 = vmatprep.subr.mxu0 0.0
    %751 = vmatpush1.msra.mxu0 0.0
    %752 = vmatprep.subr.mxu0 0.0
    %753 = vmatpush1.msra.mxu0 0.0
    %754 = vmatprep.subr.mxu0 0.0
    %755 = vmatpush1.msra.mxu0 0.0
    %756 = vmatprep.subr.mxu0 0.0
    %757 = vmatpush1.msra.mxu0 0.0
    %758 = vmatprep.subr.mxu0 0.0
    %759 = vmatpush1.msra.mxu0 0.0
    %760 = vmatprep.subr.mxu0 0.0
    %761 = vmatpush1.msra.mxu0 0.0
    %762 = vmatprep.subr.mxu0 0.0
    %763 = vmatpush1.msra.mxu0 0.0
    %764 = vmatprep.subr.mxu0 0.0
    %765 = vmatpush1.msra.mxu0 %v733
    %766 = vmatprep.subr.mxu0 0.0
    %767 = vmatpush1.msra.mxu0 %v732
    %768 = vmatprep.subr.mxu0 0.0
    %769 = vmatpush1.msra.mxu0 %v731
    %770 = vmatprep.subr.mxu0 0.0
    %771 = vmatpush1.msra.mxu0 %v730
    %772 = vmatprep.subr.mxu0 0.0
    %773 = vmatpush2.msra.mxu0 0.0
    %774 = vmatprep.subr.mxu0 0.0
    %775 = vmatpush2.msra.mxu0 0.0
    %776 = vmatprep.subr.mxu0 0.0
    %777 = vmatpush2.msra.mxu0 0.0
    %778 = vmatprep.subr.mxu0 0.0
    %779 = vmatpush2.msra.mxu0 0.0
    %780 = vmatprep.subr.mxu0 0.0
    %781 = vmatpush2.msra.mxu0 0.0
    %782 = vmatprep.subr.mxu0 0.0
    %783 = vmatpush2.msra.mxu0 0.0
    %784 = vmatprep.subr.mxu0 0.0
    %785 = vmatpush2.msra.mxu0 0.0
    %786 = vmatprep.subr.mxu0 0.0
    %787 = vmatpush2.msra.mxu0 0.0
    %788 = vmatprep.subr.mxu0 0.0
    %789 = vmatpush2.msra.mxu0 0.0
    %790 = vmatprep.subr.mxu0 0.0
    %791 = vmatpush2.msra.mxu0 0.0
    %792 = vmatprep.subr.mxu0 0.0
    %793 = vmatpush2.msra.mxu0 0.0
    %794 = vmatprep.subr.mxu0 0.0
    %795 = vmatpush2.msra.mxu0 0.0
    %796 = vmatprep.subr.mxu0 0.0
    %797 = vmatpush2.msra.mxu0 0.0
    %798 = vmatprep.subr.mxu0 0.0
    %799 = vmatpush2.msra.mxu0 0.0
    %800 = vmatprep.subr.mxu0 0.0
    %801 = vmatpush2.msra.mxu0 0.0
    %802 = vmatprep.subr.mxu0 0.0
    %803 = vmatpush2.msra.mxu0 0.0
    %804 = vmatprep.mubr.f32.mxu0 0.0
    %805 = vmatmul.mubr.f32.gmra.mxu0 %v735
    %v806 = vpop.f32.mrf.mxu0
    %v807 = vadd.f32 0.0, %v806
    %v808 = vpop.f32.mrf.mxu0
    %809 = vmatprep.mubr.f32.mxu0 0.0
    %810 = vmatmul.mubr.f32.gmra.mxu0 %v738
    %v811 = vpop.f32.mrf.mxu0
    %v812 = vadd.f32 0.0, %v811
    %v813 = vpop.f32.mrf.mxu0
    %814 = vdwg.mxu0
    %v815 = vld [vmem:[#allocation2] sm:$0xff]
    %v816 = vld [vmem:[#allocation2 + $0x8] sm:$0xff]
    %v817 = vld [vmem:[#allocation14] sm:$0xff]
    %v818 = vld [vmem:[#allocation14 + $0x8] sm:$0xff]
    %v819 = vld [vmem:[#allocation14 + $0x10] sm:$0xff]
    %v820 = vld [vmem:[#allocation14 + $0x18] sm:$0xff]
    %v821 = vld [vmem:[#allocation14 + $0x20] sm:$0xff]
    %v822 = vld [vmem:[#allocation14 + $0x28] sm:$0xff]
    %v823 = vld [vmem:[#allocation14 + $0x30] sm:$0xff]
    %v824 = vld [vmem:[#allocation14 + $0x38] sm:$0xff]
    %v825 = vld [vmem:[#allocation14 + $0x40] sm:$0xff]
    %v826 = vld [vmem:[#allocation14 + $0x48] sm:$0xff]
    %v827 = vld [vmem:[#allocation14 + $0x50] sm:$0xff]
    %v828 = vld [vmem:[#allocation14 + $0x58] sm:$0xff]
    %v829 = vld [vmem:[#allocation14 + $0x60] sm:$0xff]
    %v830 = vld [vmem:[#allocation14 + $0x68] sm:$0xff]
    %v831 = vld [vmem:[#allocation14 + $0x70] sm:$0xff]
    %v832 = vld [vmem:[#allocation14 + $0x78] sm:$0xff]
    %v833 = vld [vmem:[#allocation16] sm:$0xff]
    %v834 = vld [vmem:[#allocation16 + $0x8] sm:$0xff]
    %v835 = vld [vmem:[#allocation16 + $0x10] sm:$0xff]
    %v836 = vld [vmem:[#allocation16 + $0x18] sm:$0xff]
    %v837 = vld [vmem:[#allocation16 + $0x20] sm:$0xff]
    %v838 = vld [vmem:[#allocation16 + $0x28] sm:$0xff]
    %v839 = vld [vmem:[#allocation16 + $0x30] sm:$0xff]
    %v840 = vld [vmem:[#allocation16 + $0x38] sm:$0xff]
    %v841 = vld [vmem:[#allocation16 + $0x40] sm:$0xff]
    %v842 = vld [vmem:[#allocation16 + $0x48] sm:$0xff]
    %v843 = vld [vmem:[#allocation16 + $0x50] sm:$0xff]
    %v844 = vld [vmem:[#allocation16 + $0x58] sm:$0xff]
    %v845 = vld [vmem:[#allocation16 + $0x60] sm:$0xff]
    %v846 = vld [vmem:[#allocation16 + $0x68] sm:$0xff]
    %v847 = vld [vmem:[#allocation16 + $0x70] sm:$0xff]
    %v848 = vld [vmem:[#allocation16 + $0x78] sm:$0xff]
    %849 = vmatprep.subr.mxu0 0.0
    %850 = vmatpush1.msra.mxu0 %v848
    %851 = vmatprep.subr.mxu0 0.0
    %852 = vmatpush1.msra.mxu0 %v847
    %853 = vmatprep.subr.mxu0 0.0
    %854 = vmatpush1.msra.mxu0 %v846
    %855 = vmatprep.subr.mxu0 0.0
    %856 = vmatpush1.msra.mxu0 %v845
    %857 = vmatprep.subr.mxu0 0.0
    %858 = vmatpush1.msra.mxu0 %v844
    %859 = vmatprep.subr.mxu0 0.0
    %860 = vmatpush1.msra.mxu0 %v843
    %861 = vmatprep.subr.mxu0 0.0
    %862 = vmatpush1.msra.mxu0 %v842
    %863 = vmatprep.subr.mxu0 0.0
    %864 = vmatpush1.msra.mxu0 %v841
    %865 = vmatprep.subr.mxu0 0.0
    %866 = vmatpush1.msra.mxu0 %v840
    %867 = vmatprep.subr.mxu0 0.0
    %868 = vmatpush1.msra.mxu0 %v839
    %869 = vmatprep.subr.mxu0 0.0
    %870 = vmatpush1.msra.mxu0 %v838
    %871 = vmatprep.subr.mxu0 0.0
    %872 = vmatpush1.msra.mxu0 %v837
    %873 = vmatprep.subr.mxu0 0.0
    %874 = vmatpush1.msra.mxu0 %v836
    %875 = vmatprep.subr.mxu0 0.0
    %876 = vmatpush1.msra.mxu0 %v835
    %877 = vmatprep.subr.mxu0 0.0
    %878 = vmatpush1.msra.mxu0 %v834
    %879 = vmatprep.subr.mxu0 0.0
    %880 = vmatpush1.msra.mxu0 %v833
    %881 = vmatprep.subr.mxu0 0.0
    %882 = vmatpush2.msra.mxu0 0.0
    %883 = vmatprep.subr.mxu0 0.0
    %884 = vmatpush2.msra.mxu0 0.0
    %885 = vmatprep.subr.mxu0 0.0
    %886 = vmatpush2.msra.mxu0 0.0
    %887 = vmatprep.subr.mxu0 0.0
    %888 = vmatpush2.msra.mxu0 0.0
    %889 = vmatprep.subr.mxu0 0.0
    %890 = vmatpush2.msra.mxu0 0.0
    %891 = vmatprep.subr.mxu0 0.0
    %892 = vmatpush2.msra.mxu0 0.0
    %893 = vmatprep.subr.mxu0 0.0
    %894 = vmatpush2.msra.mxu0 0.0
    %895 = vmatprep.subr.mxu0 0.0
    %896 = vmatpush2.msra.mxu0 0.0
    %897 = vmatprep.subr.mxu0 0.0
    %898 = vmatpush2.msra.mxu0 0.0
    %899 = vmatprep.subr.mxu0 0.0
    %900 = vmatpush2.msra.mxu0 0.0
    %901 = vmatprep.subr.mxu0 0.0
    %902 = vmatpush2.msra.mxu0 0.0
    %903 = vmatprep.subr.mxu0 0.0
    %904 = vmatpush2.msra.mxu0 0.0
    %905 = vmatprep.subr.mxu0 0.0
    %906 = vmatpush2.msra.mxu0 0.0
    %907 = vmatprep.subr.mxu0 0.0
    %908 = vmatpush2.msra.mxu0 0.0
    %909 = vmatprep.subr.mxu0 0.0
    %910 = vmatpush2.msra.mxu0 0.0
    %911 = vmatprep.subr.mxu0 0.0
    %912 = vmatpush2.msra.mxu0 0.0
    %913 = vmatprep.mubr.f32.mxu0 0.0
    %914 = vmatmul.mubr.f32.gmra.mxu0 %v807
    %v915 = vpop.f32.mrf.mxu0
    %v916 = vadd.f32 0.0, %v915
    %v917 = vpop.f32.mrf.mxu0
    %918 = vmatprep.mubr.f32.mxu0 0.0
    %919 = vmatmul.mubr.f32.gmra.mxu0 %v812
    %v920 = vpop.f32.mrf.mxu0
    %v921 = vadd.f32 0.0, %v920
    %v922 = vpop.f32.mrf.mxu0
    %923 = vdwg.mxu0
    %924 = vmatprep.subr.mxu0 0.0
    %925 = vmatpush1.msra.mxu0 %v832
    %926 = vmatprep.subr.mxu0 0.0
    %927 = vmatpush1.msra.mxu0 %v831
    %928 = vmatprep.subr.mxu0 0.0
    %929 = vmatpush1.msra.mxu0 %v830
    %930 = vmatprep.subr.mxu0 0.0
    %931 = vmatpush1.msra.mxu0 %v829
    %932 = vmatprep.subr.mxu0 0.0
    %933 = vmatpush1.msra.mxu0 %v828
    %934 = vmatprep.subr.mxu0 0.0
    %935 = vmatpush1.msra.mxu0 %v827
    %936 = vmatprep.subr.mxu0 0.0
    %937 = vmatpush1.msra.mxu0 %v826
    %938 = vmatprep.subr.mxu0 0.0
    %939 = vmatpush1.msra.mxu0 %v825
    %940 = vmatprep.subr.mxu0 0.0
    %941 = vmatpush1.msra.mxu0 %v824
    %942 = vmatprep.subr.mxu0 0.0
    %943 = vmatpush1.msra.mxu0 %v823
    %944 = vmatprep.subr.mxu0 0.0
    %945 = vmatpush1.msra.mxu0 %v822
    %946 = vmatprep.subr.mxu0 0.0
    %947 = vmatpush1.msra.mxu0 %v821
    %948 = vmatprep.subr.mxu0 0.0
    %949 = vmatpush1.msra.mxu0 %v820
    %950 = vmatprep.subr.mxu0 0.0
    %951 = vmatpush1.msra.mxu0 %v819
    %952 = vmatprep.subr.mxu0 0.0
    %953 = vmatpush1.msra.mxu0 %v818
    %954 = vmatprep.subr.mxu0 0.0
    %955 = vmatpush1.msra.mxu0 %v817
    %956 = vmatprep.subr.mxu0 0.0
    %957 = vmatpush2.msra.mxu0 0.0
    %958 = vmatprep.subr.mxu0 0.0
    %959 = vmatpush2.msra.mxu0 0.0
    %960 = vmatprep.subr.mxu0 0.0
    %961 = vmatpush2.msra.mxu0 0.0
    %962 = vmatprep.subr.mxu0 0.0
    %963 = vmatpush2.msra.mxu0 0.0
    %964 = vmatprep.subr.mxu0 0.0
    %965 = vmatpush2.msra.mxu0 0.0
    %966 = vmatprep.subr.mxu0 0.0
    %967 = vmatpush2.msra.mxu0 0.0
    %968 = vmatprep.subr.mxu0 0.0
    %969 = vmatpush2.msra.mxu0 0.0
    %970 = vmatprep.subr.mxu0 0.0
    %971 = vmatpush2.msra.mxu0 0.0
    %972 = vmatprep.subr.mxu0 0.0
    %973 = vmatpush2.msra.mxu0 0.0
    %974 = vmatprep.subr.mxu0 0.0
    %975 = vmatpush2.msra.mxu0 0.0
    %976 = vmatprep.subr.mxu0 0.0
    %977 = vmatpush2.msra.mxu0 0.0
    %978 = vmatprep.subr.mxu0 0.0
    %979 = vmatpush2.msra.mxu0 0.0
    %980 = vmatprep.subr.mxu0 0.0
    %981 = vmatpush2.msra.mxu0 0.0
    %982 = vmatprep.subr.mxu0 0.0
    %983 = vmatpush2.msra.mxu0 0.0
    %984 = vmatprep.subr.mxu0 0.0
    %985 = vmatpush2.msra.mxu0 0.0
    %986 = vmatprep.subr.mxu0 0.0
    %987 = vmatpush2.msra.mxu0 0.0
    %988 = vmatprep.mubr.f32.mxu0 0.0
    %989 = vmatmul.mubr.f32.gmra.mxu0 %v815
    %v990 = vpop.f32.mrf.mxu0
    %v991 = vadd.f32 %v916, %v990
    %v992 = vpop.f32.mrf.mxu0
    %993 = vmatprep.mubr.f32.mxu0 0.0
    %994 = vmatmul.mubr.f32.gmra.mxu0 %v816
    %v995 = vpop.f32.mrf.mxu0
    %v996 = vadd.f32 %v921, %v995
    %v997 = vpop.f32.mrf.mxu0
    %998 = vdwg.mxu0
    %v999 = vld [vmem:[%s10] sm:$0x1]
    %v1001 = vlaneseq
    %v1002 = vshrl.u32 %v1001, 7
    %v1003 = vsub.s32 0, %v1002
    %v1004 = vrot.slane %v999, %v1003
    %v1006 = vadd.f32 %v991, %v1004
    %v1007 = vadd.f32 %v996, %v1004
    %v1008 = vmax.f32 %v1006, 0.0
    %v1009 = vmax.f32 %v1007, 0.0
    %v1010 = vld [vmem:[#allocation10] sm:$0xff]
    %vm1011 = vcmask 130048
    %v1013 = vsel %vm1011, %v1010, 0
    %1015 = vmatprep.subr.mxu0 0.0
    %1016 = vmatpush1.msra.mxu0 0.0
    %1017 = vmatprep.subr.mxu0 0.0
    %1018 = vmatpush1.msra.mxu0 0.0
    %1019 = vmatprep.subr.mxu0 0.0
    %1020 = vmatpush1.msra.mxu0 0.0
    %1021 = vmatprep.subr.mxu0 0.0
    %1022 = vmatpush1.msra.mxu0 0.0
    %1023 = vmatprep.subr.mxu0 0.0
    %1024 = vmatpush1.msra.mxu0 0.0
    %1025 = vmatprep.subr.mxu0 0.0
    %1026 = vmatpush1.msra.mxu0 0.0
    %1027 = vmatprep.subr.mxu0 0.0
    %1028 = vmatpush1.msra.mxu0 0.0
    %1029 = vmatprep.subr.mxu0 0.0
    %1030 = vmatpush1.msra.mxu0 0.0
    %1031 = vmatprep.subr.mxu0 0.0
    %1032 = vmatpush1.msra.mxu0 0.0
    %1033 = vmatprep.subr.mxu0 0.0
    %1034 = vmatpush1.msra.mxu0 0.0
    %1035 = vmatprep.subr.mxu0 0.0
    %1036 = vmatpush1.msra.mxu0 0.0
    %1037 = vmatprep.subr.mxu0 0.0
    %1038 = vmatpush1.msra.mxu0 0.0
    %1039 = vmatprep.subr.mxu0 0.0
    %1040 = vmatpush1.msra.mxu0 0.0
    %1041 = vmatprep.subr.mxu0 0.0
    %1042 = vmatpush1.msra.mxu0 0.0
    %1043 = vmatprep.subr.mxu0 0.0
    %1044 = vmatpush1.msra.mxu0 %v1009
    %1045 = vmatprep.subr.mxu0 0.0
    %1046 = vmatpush1.msra.mxu0 %v1008
    %1047 = vmatprep.subr.mxu0 0.0
    %1048 = vmatpush2.msra.mxu0 0.0
    %1049 = vmatprep.subr.mxu0 0.0
    %1050 = vmatpush2.msra.mxu0 0.0
    %1051 = vmatprep.subr.mxu0 0.0
    %1052 = vmatpush2.msra.mxu0 0.0
    %1053 = vmatprep.subr.mxu0 0.0
    %1054 = vmatpush2.msra.mxu0 0.0
    %1055 = vmatprep.subr.mxu0 0.0
    %1056 = vmatpush2.msra.mxu0 0.0
    %1057 = vmatprep.subr.mxu0 0.0
    %1058 = vmatpush2.msra.mxu0 0.0
    %1059 = vmatprep.subr.mxu0 0.0
    %1060 = vmatpush2.msra.mxu0 0.0
    %1061 = vmatprep.subr.mxu0 0.0
    %1062 = vmatpush2.msra.mxu0 0.0
    %1063 = vmatprep.subr.mxu0 0.0
    %1064 = vmatpush2.msra.mxu0 0.0
    %1065 = vmatprep.subr.mxu0 0.0
    %1066 = vmatpush2.msra.mxu0 0.0
    %1067 = vmatprep.subr.mxu0 0.0
    %1068 = vmatpush2.msra.mxu0 0.0
    %1069 = vmatprep.subr.mxu0 0.0
    %1070 = vmatpush2.msra.mxu0 0.0
    %1071 = vmatprep.subr.mxu0 0.0
    %1072 = vmatpush2.msra.mxu0 0.0
    %1073 = vmatprep.subr.mxu0 0.0
    %1074 = vmatpush2.msra.mxu0 0.0
    %1075 = vmatprep.subr.mxu0 0.0
    %1076 = vmatpush2.msra.mxu0 0.0
    %1077 = vmatprep.subr.mxu0 0.0
    %1078 = vmatpush2.msra.mxu0 0.0
    %1079 = vmatprep.mubr.f32.mxu0 0.0
    %1080 = vmatmul.mubr.f32.gmra.mxu0 %v1013
    %v1081 = vpop.f32.mrf.mxu0
    %v1082 = vadd.f32 0.0, %v1081
    %v1083 = vpop.f32.mrf.mxu0
    %1084 = vdwg.mxu0
    %v1085 = vld [vmem:[#allocation17] sm:$0xff]
    %v1086 = vld [vmem:[#allocation17 + $0x8] sm:$0xff]
    %v1087 = vld [vmem:[#allocation17 + $0x10] sm:$0xff]
    %v1088 = vld [vmem:[#allocation17 + $0x18] sm:$0xff]
    %v1089 = vld [vmem:[#allocation17 + $0x20] sm:$0xff]
    %v1090 = vld [vmem:[#allocation17 + $0x28] sm:$0xff]
    %v1091 = vld [vmem:[#allocation17 + $0x30] sm:$0xff]
    %v1092 = vld [vmem:[#allocation17 + $0x38] sm:$0xff]
    %v1093 = vld [vmem:[#allocation17 + $0x40] sm:$0xff]
    %v1094 = vld [vmem:[#allocation17 + $0x48] sm:$0xff]
    %v1095 = vld [vmem:[#allocation17 + $0x50] sm:$0xff]
    %v1096 = vld [vmem:[#allocation17 + $0x58] sm:$0xff]
    %v1097 = vld [vmem:[#allocation17 + $0x60] sm:$0xff]
    %v1098 = vld [vmem:[#allocation17 + $0x68] sm:$0xff]
    %v1099 = vld [vmem:[#allocation17 + $0x70] sm:$0xff]
    %v1100 = vld [vmem:[#allocation17 + $0x78] sm:$0xff]
    %v1101 = vld [vmem:[%s5] sm:$0xff]
    %v1102 = vld [vmem:[#allocation19] sm:$0xff]
    %v1103 = vld [vmem:[#allocation19 + $0x8] sm:$0xff]
    %v1104 = vld [vmem:[#allocation19 + $0x10] sm:$0xff]
    %v1105 = vld [vmem:[#allocation19 + $0x18] sm:$0xff]
    %v1106 = vld [vmem:[#allocation19 + $0x20] sm:$0xff]
    %v1107 = vld [vmem:[#allocation19 + $0x28] sm:$0xff]
    %v1108 = vld [vmem:[#allocation19 + $0x30] sm:$0xff]
    %v1109 = vld [vmem:[#allocation19 + $0x38] sm:$0xff]
    %v1110 = vld [vmem:[#allocation19 + $0x40] sm:$0xff]
    %v1111 = vld [vmem:[#allocation19 + $0x48] sm:$0xff]
    %v1112 = vld [vmem:[#allocation19 + $0x50] sm:$0xff]
    %v1113 = vld [vmem:[#allocation19 + $0x58] sm:$0xff]
    %v1114 = vld [vmem:[#allocation19 + $0x60] sm:$0xff]
    %v1115 = vld [vmem:[#allocation19 + $0x68] sm:$0xff]
    %v1116 = vld [vmem:[#allocation19 + $0x70] sm:$0xff]
    %v1117 = vld [vmem:[#allocation19 + $0x78] sm:$0xff]
    %1118 = vmatprep.subr.mxu0 0.0
    %1119 = vmatpush1.msra.mxu0 %v1117
    %1120 = vmatprep.subr.mxu0 0.0
    %1121 = vmatpush1.msra.mxu0 %v1116
    %1122 = vmatprep.subr.mxu0 0.0
    %1123 = vmatpush1.msra.mxu0 %v1115
    %1124 = vmatprep.subr.mxu0 0.0
    %1125 = vmatpush1.msra.mxu0 %v1114
    %1126 = vmatprep.subr.mxu0 0.0
    %1127 = vmatpush1.msra.mxu0 %v1113
    %1128 = vmatprep.subr.mxu0 0.0
    %1129 = vmatpush1.msra.mxu0 %v1112
    %1130 = vmatprep.subr.mxu0 0.0
    %1131 = vmatpush1.msra.mxu0 %v1111
    %1132 = vmatprep.subr.mxu0 0.0
    %1133 = vmatpush1.msra.mxu0 %v1110
    %1134 = vmatprep.subr.mxu0 0.0
    %1135 = vmatpush1.msra.mxu0 %v1109
    %1136 = vmatprep.subr.mxu0 0.0
    %1137 = vmatpush1.msra.mxu0 %v1108
    %1138 = vmatprep.subr.mxu0 0.0
    %1139 = vmatpush1.msra.mxu0 %v1107
    %1140 = vmatprep.subr.mxu0 0.0
    %1141 = vmatpush1.msra.mxu0 %v1106
    %1142 = vmatprep.subr.mxu0 0.0
    %1143 = vmatpush1.msra.mxu0 %v1105
    %1144 = vmatprep.subr.mxu0 0.0
    %1145 = vmatpush1.msra.mxu0 %v1104
    %1146 = vmatprep.subr.mxu0 0.0
    %1147 = vmatpush1.msra.mxu0 %v1103
    %1148 = vmatprep.subr.mxu0 0.0
    %1149 = vmatpush1.msra.mxu0 %v1102
    %1150 = vmatprep.subr.mxu0 0.0
    %1151 = vmatpush2.msra.mxu0 0.0
    %1152 = vmatprep.subr.mxu0 0.0
    %1153 = vmatpush2.msra.mxu0 0.0
    %1154 = vmatprep.subr.mxu0 0.0
    %1155 = vmatpush2.msra.mxu0 0.0
    %1156 = vmatprep.subr.mxu0 0.0
    %1157 = vmatpush2.msra.mxu0 0.0
    %1158 = vmatprep.subr.mxu0 0.0
    %1159 = vmatpush2.msra.mxu0 0.0
    %1160 = vmatprep.subr.mxu0 0.0
    %1161 = vmatpush2.msra.mxu0 0.0
    %1162 = vmatprep.subr.mxu0 0.0
    %1163 = vmatpush2.msra.mxu0 0.0
    %1164 = vmatprep.subr.mxu0 0.0
    %1165 = vmatpush2.msra.mxu0 0.0
    %1166 = vmatprep.subr.mxu0 0.0
    %1167 = vmatpush2.msra.mxu0 0.0
    %1168 = vmatprep.subr.mxu0 0.0
    %1169 = vmatpush2.msra.mxu0 0.0
    %1170 = vmatprep.subr.mxu0 0.0
    %1171 = vmatpush2.msra.mxu0 0.0
    %1172 = vmatprep.subr.mxu0 0.0
    %1173 = vmatpush2.msra.mxu0 0.0
    %1174 = vmatprep.subr.mxu0 0.0
    %1175 = vmatpush2.msra.mxu0 0.0
    %1176 = vmatprep.subr.mxu0 0.0
    %1177 = vmatpush2.msra.mxu0 0.0
    %1178 = vmatprep.subr.mxu0 0.0
    %1179 = vmatpush2.msra.mxu0 0.0
    %1180 = vmatprep.subr.mxu0 0.0
    %1181 = vmatpush2.msra.mxu0 0.0
    %1182 = vmatprep.mubr.f32.mxu0 0.0
    %1183 = vmatmul.mubr.f32.gmra.mxu0 %v1101
    %v1184 = vpop.f32.mrf.mxu0
    %v1185 = vadd.f32 0.0, %v1184
    %v1186 = vpop.f32.mrf.mxu0
    %1187 = vdwg.mxu0
    %1188 = vmatprep.subr.mxu0 0.0
    %1189 = vmatpush1.msra.mxu0 %v1100
    %1190 = vmatprep.subr.mxu0 0.0
    %1191 = vmatpush1.msra.mxu0 %v1099
    %1192 = vmatprep.subr.mxu0 0.0
    %1193 = vmatpush1.msra.mxu0 %v1098
    %1194 = vmatprep.subr.mxu0 0.0
    %1195 = vmatpush1.msra.mxu0 %v1097
    %1196 = vmatprep.subr.mxu0 0.0
    %1197 = vmatpush1.msra.mxu0 %v1096
    %1198 = vmatprep.subr.mxu0 0.0
    %1199 = vmatpush1.msra.mxu0 %v1095
    %1200 = vmatprep.subr.mxu0 0.0
    %1201 = vmatpush1.msra.mxu0 %v1094
    %1202 = vmatprep.subr.mxu0 0.0
    %1203 = vmatpush1.msra.mxu0 %v1093
    %1204 = vmatprep.subr.mxu0 0.0
    %1205 = vmatpush1.msra.mxu0 %v1092
    %1206 = vmatprep.subr.mxu0 0.0
    %1207 = vmatpush1.msra.mxu0 %v1091
    %1208 = vmatprep.subr.mxu0 0.0
    %1209 = vmatpush1.msra.mxu0 %v1090
    %1210 = vmatprep.subr.mxu0 0.0
    %1211 = vmatpush1.msra.mxu0 %v1089
    %1212 = vmatprep.subr.mxu0 0.0
    %1213 = vmatpush1.msra.mxu0 %v1088
    %1214 = vmatprep.subr.mxu0 0.0
    %1215 = vmatpush1.msra.mxu0 %v1087
    %1216 = vmatprep.subr.mxu0 0.0
    %1217 = vmatpush1.msra.mxu0 %v1086
    %1218 = vmatprep.subr.mxu0 0.0
    %1219 = vmatpush1.msra.mxu0 %v1085
    %1220 = vmatprep.subr.mxu0 0.0
    %1221 = vmatpush2.msra.mxu0 0.0
    %1222 = vmatprep.subr.mxu0 0.0
    %1223 = vmatpush2.msra.mxu0 0.0
    %1224 = vmatprep.subr.mxu0 0.0
    %1225 = vmatpush2.msra.mxu0 0.0
    %1226 = vmatprep.subr.mxu0 0.0
    %1227 = vmatpush2.msra.mxu0 0.0
    %1228 = vmatprep.subr.mxu0 0.0
    %1229 = vmatpush2.msra.mxu0 0.0
    %1230 = vmatprep.subr.mxu0 0.0
    %1231 = vmatpush2.msra.mxu0 0.0
    %1232 = vmatprep.subr.mxu0 0.0
    %1233 = vmatpush2.msra.mxu0 0.0
    %1234 = vmatprep.subr.mxu0 0.0
    %1235 = vmatpush2.msra.mxu0 0.0
    %1236 = vmatprep.subr.mxu0 0.0
    %1237 = vmatpush2.msra.mxu0 0.0
    %1238 = vmatprep.subr.mxu0 0.0
    %1239 = vmatpush2.msra.mxu0 0.0
    %1240 = vmatprep.subr.mxu0 0.0
    %1241 = vmatpush2.msra.mxu0 0.0
    %1242 = vmatprep.subr.mxu0 0.0
    %1243 = vmatpush2.msra.mxu0 0.0
    %1244 = vmatprep.subr.mxu0 0.0
    %1245 = vmatpush2.msra.mxu0 0.0
    %1246 = vmatprep.subr.mxu0 0.0
    %1247 = vmatpush2.msra.mxu0 0.0
    %1248 = vmatprep.subr.mxu0 0.0
    %1249 = vmatpush2.msra.mxu0 0.0
    %1250 = vmatprep.subr.mxu0 0.0
    %1251 = vmatpush2.msra.mxu0 0.0
    %1252 = vmatprep.mubr.f32.mxu0 0.0
    %1253 = vmatmul.mubr.f32.gmra.mxu0 %v1082
    %v1254 = vpop.f32.mrf.mxu0
    %v1255 = vadd.f32 %v1185, %v1254
    %v1256 = vpop.f32.mrf.mxu0
    %1257 = vdwg.mxu0
    %v1258 = vld [vmem:[%s13] sm:$0x1]
    %v1260 = vlaneseq
    %v1261 = vshrl.u32 %v1260, 7
    %v1262 = vsub.s32 0, %v1261
    %v1263 = vrot.slane %v1258, %v1262
    %v1265 = vadd.f32 %v1255, %v1263
    %v1266 = vmax.f32 %v1265, 0.0
    %v1267 = vld [vmem:[#allocation20] sm:$0xff]
    %v1268 = vld [vmem:[#allocation20 + $0x8] sm:$0xff]
    %v1269 = vld [vmem:[#allocation20 + $0x10] sm:$0xff]
    %v1270 = vld [vmem:[#allocation20 + $0x18] sm:$0xff]
    %v1271 = vld [vmem:[#allocation20 + $0x20] sm:$0xff]
    %v1272 = vld [vmem:[#allocation20 + $0x28] sm:$0xff]
    %v1273 = vld [vmem:[#allocation20 + $0x30] sm:$0xff]
    %v1274 = vld [vmem:[#allocation20 + $0x38] sm:$0xff]
    %v1275 = vld [vmem:[#allocation20 + $0x40] sm:$0xff]
    %v1276 = vld [vmem:[#allocation20 + $0x48] sm:$0xff]
    %v1277 = vld [vmem:[#allocation20 + $0x50] sm:$0xff]
    %v1278 = vld [vmem:[#allocation20 + $0x58] sm:$0xff]
    %v1279 = vld [vmem:[#allocation20 + $0x60] sm:$0xff]
    %v1280 = vld [vmem:[#allocation20 + $0x68] sm:$0xff]
    %v1281 = vld [vmem:[#allocation20 + $0x70] sm:$0xff]
    %v1282 = vld [vmem:[#allocation20 + $0x78] sm:$0xff]
    %v1283 = vld [vmem:[%s15] sm:$0x1]
    %v1285 = vlaneseq
    %v1286 = vshrl.u32 %v1285, 7
    %v1287 = vsub.s32 0, %v1286
    %v1288 = vrot.slane %v1283, %v1287
    %1290 = vmatprep.subr.mxu0 0.0
    %1291 = vmatpush1.msra.mxu0 %v1282
    %1292 = vmatprep.subr.mxu0 0.0
    %1293 = vmatpush1.msra.mxu0 %v1281
    %1294 = vmatprep.subr.mxu0 0.0
    %1295 = vmatpush1.msra.mxu0 %v1280
    %1296 = vmatprep.subr.mxu0 0.0
    %1297 = vmatpush1.msra.mxu0 %v1279
    %1298 = vmatprep.subr.mxu0 0.0
    %1299 = vmatpush1.msra.mxu0 %v1278
    %1300 = vmatprep.subr.mxu0 0.0
    %1301 = vmatpush1.msra.mxu0 %v1277
    %1302 = vmatprep.subr.mxu0 0.0
    %1303 = vmatpush1.msra.mxu0 %v1276
    %1304 = vmatprep.subr.mxu0 0.0
    %1305 = vmatpush1.msra.mxu0 %v1275
    %1306 = vmatprep.subr.mxu0 0.0
    %1307 = vmatpush1.msra.mxu0 %v1274
    %1308 = vmatprep.subr.mxu0 0.0
    %1309 = vmatpush1.msra.mxu0 %v1273
    %1310 = vmatprep.subr.mxu0 0.0
    %1311 = vmatpush1.msra.mxu0 %v1272
    %1312 = vmatprep.subr.mxu0 0.0
    %1313 = vmatpush1.msra.mxu0 %v1271
    %1314 = vmatprep.subr.mxu0 0.0
    %1315 = vmatpush1.msra.mxu0 %v1270
    %1316 = vmatprep.subr.mxu0 0.0
    %1317 = vmatpush1.msra.mxu0 %v1269
    %1318 = vmatprep.subr.mxu0 0.0
    %1319 = vmatpush1.msra.mxu0 %v1268
    %1320 = vmatprep.subr.mxu0 0.0
    %1321 = vmatpush1.msra.mxu0 %v1267
    %1322 = vmatprep.subr.mxu0 0.0
    %1323 = vmatpush2.msra.mxu0 0.0
    %1324 = vmatprep.subr.mxu0 0.0
    %1325 = vmatpush2.msra.mxu0 0.0
    %1326 = vmatprep.subr.mxu0 0.0
    %1327 = vmatpush2.msra.mxu0 0.0
    %1328 = vmatprep.subr.mxu0 0.0
    %1329 = vmatpush2.msra.mxu0 0.0
    %1330 = vmatprep.subr.mxu0 0.0
    %1331 = vmatpush2.msra.mxu0 0.0
    %1332 = vmatprep.subr.mxu0 0.0
    %1333 = vmatpush2.msra.mxu0 0.0
    %1334 = vmatprep.subr.mxu0 0.0
    %1335 = vmatpush2.msra.mxu0 0.0
    %1336 = vmatprep.subr.mxu0 0.0
    %1337 = vmatpush2.msra.mxu0 0.0
    %1338 = vmatprep.subr.mxu0 0.0
    %1339 = vmatpush2.msra.mxu0 0.0
    %1340 = vmatprep.subr.mxu0 0.0
    %1341 = vmatpush2.msra.mxu0 0.0
    %1342 = vmatprep.subr.mxu0 0.0
    %1343 = vmatpush2.msra.mxu0 0.0
    %1344 = vmatprep.subr.mxu0 0.0
    %1345 = vmatpush2.msra.mxu0 0.0
    %1346 = vmatprep.subr.mxu0 0.0
    %1347 = vmatpush2.msra.mxu0 0.0
    %1348 = vmatprep.subr.mxu0 0.0
    %1349 = vmatpush2.msra.mxu0 0.0
    %1350 = vmatprep.subr.mxu0 0.0
    %1351 = vmatpush2.msra.mxu0 0.0
    %1352 = vmatprep.subr.mxu0 0.0
    %1353 = vmatpush2.msra.mxu0 0.0
    %1354 = vmatprep.mubr.f32.mxu0 0.0
    %1355 = vmatmul.mubr.f32.gmra.mxu0 %v1266
    %v1356 = vpop.f32.mrf.mxu0
    %v1357 = vadd.f32 %v1288, %v1356
    %v1358 = vpop.f32.mrf.mxu0
    %1359 = vdwg.mxu0
    %v1360 = vmax.f32 %v1357, 0.0
    %v1361 = vld [vmem:[#allocation22] sm:$0xff]
    %v1362 = vld [vmem:[#allocation22 + $0x8] sm:$0xff]
    %v1363 = vld [vmem:[#allocation22 + $0x10] sm:$0xff]
    %v1364 = vld [vmem:[#allocation22 + $0x18] sm:$0xff]
    %v1365 = vld [vmem:[#allocation22 + $0x20] sm:$0xff]
    %v1366 = vld [vmem:[#allocation22 + $0x28] sm:$0xff]
    %v1367 = vld [vmem:[#allocation22 + $0x30] sm:$0xff]
    %v1368 = vld [vmem:[#allocation22 + $0x38] sm:$0xff]
    %v1369 = vld [vmem:[#allocation22 + $0x40] sm:$0xff]
    %v1370 = vld [vmem:[#allocation22 + $0x48] sm:$0xff]
    %v1371 = vld [vmem:[#allocation22 + $0x50] sm:$0xff]
    %v1372 = vld [vmem:[#allocation22 + $0x58] sm:$0xff]
    %v1373 = vld [vmem:[#allocation22 + $0x60] sm:$0xff]
    %v1374 = vld [vmem:[#allocation22 + $0x68] sm:$0xff]
    %v1375 = vld [vmem:[#allocation22 + $0x70] sm:$0xff]
    %v1376 = vld [vmem:[#allocation22 + $0x78] sm:$0xff]
    %v1377 = vld [vmem:[%s17] sm:$0x1]
    %v1379 = vlaneseq
    %v1380 = vshrl.u32 %v1379, 7
    %v1381 = vsub.s32 0, %v1380
    %v1382 = vrot.slane %v1377, %v1381
    %1384 = vmatprep.subr.mxu0 0.0
    %1385 = vmatpush1.msra.mxu0 %v1376
    %1386 = vmatprep.subr.mxu0 0.0
    %1387 = vmatpush1.msra.mxu0 %v1375
    %1388 = vmatprep.subr.mxu0 0.0
    %1389 = vmatpush1.msra.mxu0 %v1374
    %1390 = vmatprep.subr.mxu0 0.0
    %1391 = vmatpush1.msra.mxu0 %v1373
    %1392 = vmatprep.subr.mxu0 0.0
    %1393 = vmatpush1.msra.mxu0 %v1372
    %1394 = vmatprep.subr.mxu0 0.0
    %1395 = vmatpush1.msra.mxu0 %v1371
    %1396 = vmatprep.subr.mxu0 0.0
    %1397 = vmatpush1.msra.mxu0 %v1370
    %1398 = vmatprep.subr.mxu0 0.0
    %1399 = vmatpush1.msra.mxu0 %v1369
    %1400 = vmatprep.subr.mxu0 0.0
    %1401 = vmatpush1.msra.mxu0 %v1368
    %1402 = vmatprep.subr.mxu0 0.0
    %1403 = vmatpush1.msra.mxu0 %v1367
    %1404 = vmatprep.subr.mxu0 0.0
    %1405 = vmatpush1.msra.mxu0 %v1366
    %1406 = vmatprep.subr.mxu0 0.0
    %1407 = vmatpush1.msra.mxu0 %v1365
    %1408 = vmatprep.subr.mxu0 0.0
    %1409 = vmatpush1.msra.mxu0 %v1364
    %1410 = vmatprep.subr.mxu0 0.0
    %1411 = vmatpush1.msra.mxu0 %v1363
    %1412 = vmatprep.subr.mxu0 0.0
    %1413 = vmatpush1.msra.mxu0 %v1362
    %1414 = vmatprep.subr.mxu0 0.0
    %1415 = vmatpush1.msra.mxu0 %v1361
    %1416 = vmatprep.subr.mxu0 0.0
    %1417 = vmatpush2.msra.mxu0 0.0
    %1418 = vmatprep.subr.mxu0 0.0
    %1419 = vmatpush2.msra.mxu0 0.0
    %1420 = vmatprep.subr.mxu0 0.0
    %1421 = vmatpush2.msra.mxu0 0.0
    %1422 = vmatprep.subr.mxu0 0.0
    %1423 = vmatpush2.msra.mxu0 0.0
    %1424 = vmatprep.subr.mxu0 0.0
    %1425 = vmatpush2.msra.mxu0 0.0
    %1426 = vmatprep.subr.mxu0 0.0
    %1427 = vmatpush2.msra.mxu0 0.0
    %1428 = vmatprep.subr.mxu0 0.0
    %1429 = vmatpush2.msra.mxu0 0.0
    %1430 = vmatprep.subr.mxu0 0.0
    %1431 = vmatpush2.msra.mxu0 0.0
    %1432 = vmatprep.subr.mxu0 0.0
    %1433 = vmatpush2.msra.mxu0 0.0
    %1434 = vmatprep.subr.mxu0 0.0
    %1435 = vmatpush2.msra.mxu0 0.0
    %1436 = vmatprep.subr.mxu0 0.0
    %1437 = vmatpush2.msra.mxu0 0.0
    %1438 = vmatprep.subr.mxu0 0.0
    %1439 = vmatpush2.msra.mxu0 0.0
    %1440 = vmatprep.subr.mxu0 0.0
    %1441 = vmatpush2.msra.mxu0 0.0
    %1442 = vmatprep.subr.mxu0 0.0
    %1443 = vmatpush2.msra.mxu0 0.0
    %1444 = vmatprep.subr.mxu0 0.0
    %1445 = vmatpush2.msra.mxu0 0.0
    %1446 = vmatprep.subr.mxu0 0.0
    %1447 = vmatpush2.msra.mxu0 0.0
    %1448 = vmatprep.mubr.f32.mxu0 0.0
    %1449 = vmatmul.mubr.f32.gmra.mxu0 %v1360
    %v1450 = vpop.f32.mrf.mxu0
    %v1451 = vadd.f32 %v1382, %v1450
    %v1452 = vpop.f32.mrf.mxu0
    %1453 = vdwg.mxu0
    %v1454 = vmax.f32 %v1451, 0.0
    %1455 = vst [vmem:[#allocation23] sm:$0xff] %v1454
    // Predicated region
    $region126: #{tpu_custom_call.1} parent=1 // pred_check
      _
    $region127: #{tpu_custom_call.1} parent=1 // pred_check_branch
      %1457 = sbr.rel (0) target = $region129
    $region128: #{tpu_custom_call.1} parent=1 // pred_region
      %s1459 = ssub.s32 128, 128
      %1460 = vsyncadd [#allocation4], %s1459
      %s1462 = sshll.u32 [#allocation23], 4
      %s1463 = int_to_ptr.vmem [resolvable:$true] %s1462
      %1465 = dma.vmem_to_hbm [thread:$0]  %s1463, 128, %s18, [#allocation4]
    $region129: #{tpu_custom_call.1} parent=1 // pred_fallthru
      _
    // Predicated region
    $region130: #{tpu_custom_call.1} parent=1 // pred_check
      _
    $region131: #{tpu_custom_call.1} parent=1 // pred_check_branch
      %1467 = sbr.rel (0) target = $region133
    $region132: #{tpu_custom_call.1} parent=1 // pred_region
      %1468 = dma.done [#allocation4], 128
    $region133: #{tpu_custom_call.1} parent=1 // pred_fallthru
      _
    %1469 = vsyncpa [#allocation3], 1
    %1470 = vsyncpa [#allocation6], 1
    %1471 = vsyncpa [#allocation9], 1
    %1472 = vsyncpa [#allocation12], 1
    %1473 = vsyncpa [#allocation15], 1
    %1474 = vsyncpa [#allocation18], 1
    %1475 = vsyncpa [#allocation21], 1
    %1476 = vsyncpa [#allocation4], 1

</llo_original>
